<compile_context>
chip_gen: v6e
topology: v6e:2x2x1
jax: 0.10.0
libtpu: 0.0.40
codegen_flags: <defaults>
</compile_context>

<pallas_src>
import functools

import jax
import jax.numpy as jnp
from jax.experimental import pallas as pl
from jax.experimental.pallas import tpu as pltpu


_ROW_ALIGN = 16          # bf16 sublane tile height
_SLAB_COLS = 256         # max d_out across all layers (lane-padded slab width)
_OUT_COLS = 128          # lane-padded output slab width (>= input_dim + latent_dim)


def _round_up(x, m):
    return ((x + m - 1) // m) * m


def _leaky_relu(t):
    return jnp.maximum(t, 0.01 * t)        # PyTorch default negative slope


def _sigmoid(y):
    # Numerically stable sigmoid; tanh routes to the EUP slot.
    return 0.5 * (jnp.tanh(0.5 * y) + 1.0)


# ----------------------------------------------------------------------------
# Fused kernel: entire WAE forward in one body.
#   x_ref  : (n, input_dim) f32
#   p_ref  : (rows, 256) bf16 packed parameter slab
#   out_ref: (n, 128) f32 -- cols [0:input_dim]=recon, [input_dim:+latent]=z
# `layout` holds static (row, d_in, d_out, aux_row) tuples per layer.
# ----------------------------------------------------------------------------
def wae_fused_kernel(x_ref, p_ref, out_ref, *, layout, n_out, n_lat, eps=1e-5):
    h = x_ref[...].astype(jnp.float32)

    def matmul(h, r_w, d_in, d_out):
        w = p_ref[r_w:r_w + d_in, :d_out]                      # bf16 static view
        return jnp.dot(h.astype(jnp.bfloat16), w,
                       preferred_element_type=jnp.float32)

    def lin(h, spec):
        r_w, d_in, d_out, r_b = spec
        b = p_ref[r_b:r_b + 1, :d_out].astype(jnp.float32)
        return matmul(h, r_w, d_in, d_out) + b

    def lin_bn_lrelu(h, spec):
        r_w, d_in, d_out, r_aff = spec
        y = matmul(h, r_w, d_in, d_out)       # pre-BN Linear bias is dead: dropped
        aff = p_ref[r_aff:r_aff + 2, :d_out].astype(jnp.float32)
        g, beta = aff[0:1, :], aff[1:2, :]
        # One-pass batch statistics: two independent reductions.
        mean = jnp.mean(y, axis=0, keepdims=True)
        mean_sq = jnp.mean(y * y, axis=0, keepdims=True)
        var = jnp.maximum(mean_sq - mean * mean, 0.0)          # biased, clamped
        t = (y - mean) * jax.lax.rsqrt(var + eps) * g + beta
        return _leaky_relu(t)

    for spec in layout["enc"]:
        h = lin_bn_lrelu(h, spec)
    z = lin(h, layout["fc_z"])
    h = lin(z, layout["dec_in"])
    for spec in layout["dec"]:
        h = lin_bn_lrelu(h, spec)
    recon = _sigmoid(lin(h, layout["final"]))

    out_ref[...] = jnp.zeros_like(out_ref)                     # clear pad lanes
    out_ref[:, 0:n_out] = recon.astype(out_ref.dtype)
    out_ref[:, n_out:n_out + n_lat] = z.astype(out_ref.dtype)


# ----------------------------------------------------------------------------
# Parameter init (PyTorch-like uniform for Linear; BN affine slightly perturbed
# from (1, 0) so the gamma/beta paths are actually exercised by the test).
# Everything is stored in bf16 (MXU-native).
# ----------------------------------------------------------------------------
def init_wae_params(key, input_dim, latent_dim, hidden_dims):
    keys = iter(jax.random.split(key, 64))

    def linear(d_in, d_out, with_bias=True):
        kw, kb = jax.random.split(next(keys))
        bound = float(1.0 / (d_in ** 0.5))
        w = jax.random.uniform(kw, (d_in, d_out), jnp.float32, -bound, bound)
        w = w.astype(jnp.bfloat16)
        if not with_bias:
            return w
        b = jax.random.uniform(kb, (1, d_out), jnp.float32, -bound, bound)
        return w, b.astype(jnp.bfloat16)

    def bn_affine(d_out):
        kg, kb = jax.random.split(next(keys))
        gamma = 1.0 + 0.2 * jax.random.uniform(kg, (1, d_out), jnp.float32, -1.0, 1.0)
        beta = 0.2 * jax.random.uniform(kb, (1, d_out), jnp.float32, -1.0, 1.0)
        return gamma.astype(jnp.bfloat16), beta.astype(jnp.bfloat16)

    params = {"enc": [], "dec": []}
    d_in = input_dim
    for h in hidden_dims:
        w = linear(d_in, h, with_bias=False)   # bias cancelled by BN mean subtraction
        g, beta = bn_affine(h)
        params["enc"].append((w, g, beta))
        d_in = h
    params["fc_z"] = linear(hidden_dims[-1], latent_dim)
    params["dec_in"] = linear(latent_dim, hidden_dims[-1])
    rev = list(reversed(hidden_dims))
    for i in range(len(rev) - 1):
        w = linear(rev[i], rev[i + 1], with_bias=False)
        g, beta = bn_affine(rev[i + 1])
        params["dec"].append((w, g, beta))
    params["final"] = linear(rev[-1], input_dim)
    return params


# ----------------------------------------------------------------------------
# Pack every parameter into a single lane-padded bf16 slab + static layout.
# ----------------------------------------------------------------------------
def pack_params(params, slab_cols=_SLAB_COLS):
    placed = []                       # (row_offset, array)
    layout = {"enc": [], "dec": []}
    cursor = 0

    def place(arr):
        nonlocal cursor
        r0 = cursor
        placed.append((r0, arr))
        cursor += _round_up(arr.shape[0], _ROW_ALIGN)
        return r0

    def place_lin(w, b):
        r_w = place(w)
        r_b = place(b)
        return (r_w, w.shape[0], w.shape[1], r_b)

    def place_bn(w, g, beta):
        r_w = place(w)
        r_a = place(jnp.concatenate([g, beta], axis=0))   # (2, d_out): gamma; beta
        return (r_w, w.shape[0], w.shape[1], r_a)

    for (w, g, beta) in params["enc"]:
        layout["enc"].append(place_bn(w, g, beta))
    layout["fc_z"] = place_lin(*params["fc_z"])
    layout["dec_in"] = place_lin(*params["dec_in"])
    for (w, g, beta) in params["dec"]:
        layout["dec"].append(place_bn(w, g, beta))
    layout["final"] = place_lin(*params["final"])

    total_rows = _round_up(cursor, _ROW_ALIGN)
    slab = jnp.zeros((total_rows, slab_cols), jnp.bfloat16)
    for r0, arr in placed:
        slab = slab.at[r0:r0 + arr.shape[0], :arr.shape[1]].set(arr.astype(jnp.bfloat16))
    layout["enc"] = tuple(layout["enc"])
    layout["dec"] = tuple(layout["dec"])
    return slab, layout


# ----------------------------------------------------------------------------
# Wrapper: single jitted pallas_call, two inputs, one lane-padded output slab.
# ----------------------------------------------------------------------------
def make_wae_forward(layout, input_dim, latent_dim):
    kernel = functools.partial(
        wae_fused_kernel, layout=layout, n_out=input_dim, n_lat=latent_dim)
    vmem = pl.BlockSpec(memory_space=pltpu.MemorySpace.VMEM)

    @jax.jit
    def fwd(slab, x):
        n = x.shape[0]
        out = pl.pallas_call(
            kernel,
            out_shape=jax.ShapeDtypeStruct((n, _OUT_COLS), jnp.float32),
            in_specs=[vmem, vmem],
            out_specs=vmem,
        )(x, slab)
        recon = out[:, :input_dim]
        z = out[:, input_dim:input_dim + latent_dim]
        return [recon, x, z]

    return fwd


# ----------------------------------------------------------------------------
# Pure-JAX reference (same bf16 params, PyTorch two-pass BN variance) for a
# correctness check of the fused kernel.
# ----------------------------------------------------------------------------
def wae_forward_reference(params, x, eps=1e-5):
    def mm(h, w):
        return jnp.dot(h.astype(jnp.bfloat16), w, preferred_element_type=jnp.float32)

    def block(h, w, g, beta):
        y = mm(h, w)
        mean = y.mean(0, keepdims=True)
        var = ((y - mean) ** 2).mean(0, keepdims=True)
        t = (y - mean) / jnp.sqrt(var + eps) * g.astype(jnp.float32) + beta.astype(jnp.float32)
        return jnp.where(t > 0, t, 0.01 * t)

    h = x.astype(jnp.float32)
    for (w, g, beta) in params["enc"]:
        h = block(h, w, g, beta)
    wz, bz = params["fc_z"]
    z = mm(h, wz) + bz.astype(jnp.float32)
    wd, bd = params["dec_in"]
    h = mm(z, wd) + bd.astype(jnp.float32)
    for (w, g, beta) in params["dec"]:
        h = block(h, w, g, beta)
    wf, bf = params["final"]
    recon = jax.nn.sigmoid(mm(h, wf) + bf.astype(jnp.float32))
    return recon, z


# ----------------------------------------------------------------------------
if __name__ == "__main__":
    batch = 8
    input_dim = 16
    latent_dim = 8
    hidden_dims = [32, 64, 128, 256]   # module defaults

    key = jax.random.PRNGKey(0)
    k_param, k_x = jax.random.split(key)

    params = init_wae_params(k_param, input_dim, latent_dim, hidden_dims)
    slab, layout = pack_params(params)
    x = jax.random.uniform(k_x, (batch, input_dim), jnp.float32)

    wae_forward = make_wae_forward(layout, input_dim, latent_dim)
    recon, x_out, z = wae_forward(slab, x)
    jax.block_until_ready((recon, x_out, z))

    # Correctness vs. pure-JAX reference (same bf16 params).
    recon_ref, z_ref = wae_forward_reference(params, x)

    assert recon.shape == (batch, input_dim)
    assert z.shape == (batch, latent_dim)
    assert bool(jnp.all(jnp.isfinite(recon))) and bool(jnp.all(jnp.isfinite(z)))
    assert bool(jnp.all(recon >= 0.0)) and bool(jnp.all(recon <= 1.0))
    assert bool(jnp.allclose(z, z_ref, atol=2e-3, rtol=2e-3))
    assert bool(jnp.allclose(recon, recon_ref, atol=2e-3, rtol=2e-3))
    assert bool(jnp.allclose(x_out, x))

    # TODO(synk): loss_function / compute_mmd (prior sampling + IMQ kernel) and
    # BN running-stat updates are not part of forward() and are left out.
    # TODO(synk): when scaling the batch, keep BN statistics global (two-pass
    # stats or eval-mode BN) before adding a "parallel" batch grid axis.
    print("KERNEL_OK")
</pallas_src>

<mosaic_0001>
module attributes {stable_mosaic.version = 11 : i64} {
  func.func @wae_fused_kernel(%arg0: memref<8x16xf32, #tpu.memory_space<vmem>>, %arg1: memref<1152x256xbf16, #tpu.memory_space<vmem>>, %arg2: memref<8x128xf32, #tpu.memory_space<vmem>>) attributes {dimension_semantics = [], scalar_prefetch = 0 : i64, scratch_operands = 0 : i64, tpu.core_type = #tpu.core_type<tc>} {
    %c0 = arith.constant 0 : index
    %c0_0 = arith.constant 0 : index
    %0 = vector.load %arg0[%c0, %c0_0] : memref<8x16xf32, #tpu.memory_space<vmem>>, vector<8x16xf32>
    %c0_1 = arith.constant 0 : index
    %c0_2 = arith.constant 0 : index
    %1 = vector.load %arg1[%c0_1, %c0_2] : memref<1152x256xbf16, #tpu.memory_space<vmem>>, vector<16x32xbf16>
    %2 = arith.truncf %0 : vector<8x16xf32> to vector<8x16xbf16>
    %cst = arith.constant dense<0.000000e+00> : vector<8x32xf32>
    %3 = tpu.matmul %2, %1, %cst {dimension_numbers = #tpu.dot_dimension_numbers<[1], [0], [0], [1], [0, 0, 1, 1], [], []>} : vector<8x16xbf16>, vector<16x32xbf16>, vector<8x32xf32> -> vector<8x32xf32>
    %c16 = arith.constant 16 : index
    %c0_3 = arith.constant 0 : index
    %4 = vector.load %arg1[%c16, %c0_3] : memref<1152x256xbf16, #tpu.memory_space<vmem>>, vector<2x32xbf16>
    %5 = arith.extf %4 : vector<2x32xbf16> to vector<2x32xf32>
    %6 = vector.extract_strided_slice %5 {offsets = [0, 0], sizes = [1, 32], strides = [1, 1]} : vector<2x32xf32> to vector<1x32xf32>
    %7 = vector.extract_strided_slice %5 {offsets = [1, 0], sizes = [1, 32], strides = [1, 1]} : vector<2x32xf32> to vector<1x32xf32>
    %cst_4 = arith.constant dense<0.000000e+00> : vector<32xf32>
    %8 = vector.multi_reduction <add>, %3, %cst_4 [0] : vector<8x32xf32> to vector<32xf32>
    %9 = vector.shape_cast %8 : vector<32xf32> to vector<1x32xf32>
    %cst_5 = arith.constant 8.000000e+00 : f32
    %10 = vector.broadcast %cst_5 : f32 to vector<1x32xf32>
    %11 = arith.divf %9, %10 : vector<1x32xf32>
    %12 = arith.mulf %3, %3 : vector<8x32xf32>
    %cst_6 = arith.constant dense<0.000000e+00> : vector<32xf32>
    %13 = vector.multi_reduction <add>, %12, %cst_6 [0] : vector<8x32xf32> to vector<32xf32>
    %14 = vector.shape_cast %13 : vector<32xf32> to vector<1x32xf32>
    %cst_7 = arith.constant 8.000000e+00 : f32
    %15 = vector.broadcast %cst_7 : f32 to vector<1x32xf32>
    %16 = arith.divf %14, %15 : vector<1x32xf32>
    %17 = arith.mulf %11, %11 : vector<1x32xf32>
    %18 = arith.subf %16, %17 : vector<1x32xf32>
    %cst_8 = arith.constant 0.000000e+00 : f32
    %19 = vector.broadcast %cst_8 : f32 to vector<1x32xf32>
    %20 = arith.maximumf %18, %19 : vector<1x32xf32>
    %21 = vector.broadcast %11 : vector<1x32xf32> to vector<8x32xf32>
    %22 = arith.subf %3, %21 : vector<8x32xf32>
    %cst_9 = arith.constant 9.99999974E-6 : f32
    %23 = vector.broadcast %cst_9 : f32 to vector<1x32xf32>
    %24 = arith.addf %20, %23 : vector<1x32xf32>
    %25 = math.rsqrt %24 : vector<1x32xf32>
    %26 = vector.broadcast %25 : vector<1x32xf32> to vector<8x32xf32>
    %27 = arith.mulf %22, %26 : vector<8x32xf32>
    %28 = vector.broadcast %6 : vector<1x32xf32> to vector<8x32xf32>
    %29 = arith.mulf %27, %28 : vector<8x32xf32>
    %30 = vector.broadcast %7 : vector<1x32xf32> to vector<8x32xf32>
    %31 = arith.addf %29, %30 : vector<8x32xf32>
    %cst_10 = arith.constant 0.00999999977 : f32
    %32 = vector.broadcast %cst_10 : f32 to vector<8x32xf32>
    %33 = arith.mulf %32, %31 : vector<8x32xf32>
    %34 = arith.maximumf %31, %33 : vector<8x32xf32>
    %c32 = arith.constant 32 : index
    %c0_11 = arith.constant 0 : index
    %35 = vector.load %arg1[%c32, %c0_11] : memref<1152x256xbf16, #tpu.memory_space<vmem>>, vector<32x64xbf16>
    %36 = arith.truncf %34 : vector<8x32xf32> to vector<8x32xbf16>
    %cst_12 = arith.constant dense<0.000000e+00> : vector<8x64xf32>
    %37 = tpu.matmul %36, %35, %cst_12 {dimension_numbers = #tpu.dot_dimension_numbers<[1], [0], [0], [1], [0, 0, 1, 1], [], []>} : vector<8x32xbf16>, vector<32x64xbf16>, vector<8x64xf32> -> vector<8x64xf32>
    %c64 = arith.constant 64 : index
    %c0_13 = arith.constant 0 : index
    %38 = vector.load %arg1[%c64, %c0_13] : memref<1152x256xbf16, #tpu.memory_space<vmem>>, vector<2x64xbf16>
    %39 = arith.extf %38 : vector<2x64xbf16> to vector<2x64xf32>
    %40 = vector.extract_strided_slice %39 {offsets = [0, 0], sizes = [1, 64], strides = [1, 1]} : vector<2x64xf32> to vector<1x64xf32>
    %41 = vector.extract_strided_slice %39 {offsets = [1, 0], sizes = [1, 64], strides = [1, 1]} : vector<2x64xf32> to vector<1x64xf32>
    %cst_14 = arith.constant dense<0.000000e+00> : vector<64xf32>
    %42 = vector.multi_reduction <add>, %37, %cst_14 [0] : vector<8x64xf32> to vector<64xf32>
    %43 = vector.shape_cast %42 : vector<64xf32> to vector<1x64xf32>
    %cst_15 = arith.constant 8.000000e+00 : f32
    %44 = vector.broadcast %cst_15 : f32 to vector<1x64xf32>
    %45 = arith.divf %43, %44 : vector<1x64xf32>
    %46 = arith.mulf %37, %37 : vector<8x64xf32>
    %cst_16 = arith.constant dense<0.000000e+00> : vector<64xf32>
    %47 = vector.multi_reduction <add>, %46, %cst_16 [0] : vector<8x64xf32> to vector<64xf32>
    %48 = vector.shape_cast %47 : vector<64xf32> to vector<1x64xf32>
    %cst_17 = arith.constant 8.000000e+00 : f32
    %49 = vector.broadcast %cst_17 : f32 to vector<1x64xf32>
    %50 = arith.divf %48, %49 : vector<1x64xf32>
    %51 = arith.mulf %45, %45 : vector<1x64xf32>
    %52 = arith.subf %50, %51 : vector<1x64xf32>
    %cst_18 = arith.constant 0.000000e+00 : f32
    %53 = vector.broadcast %cst_18 : f32 to vector<1x64xf32>
    %54 = arith.maximumf %52, %53 : vector<1x64xf32>
    %55 = vector.broadcast %45 : vector<1x64xf32> to vector<8x64xf32>
    %56 = arith.subf %37, %55 : vector<8x64xf32>
    %cst_19 = arith.constant 9.99999974E-6 : f32
    %57 = vector.broadcast %cst_19 : f32 to vector<1x64xf32>
    %58 = arith.addf %54, %57 : vector<1x64xf32>
    %59 = math.rsqrt %58 : vector<1x64xf32>
    %60 = vector.broadcast %59 : vector<1x64xf32> to vector<8x64xf32>
    %61 = arith.mulf %56, %60 : vector<8x64xf32>
    %62 = vector.broadcast %40 : vector<1x64xf32> to vector<8x64xf32>
    %63 = arith.mulf %61, %62 : vector<8x64xf32>
    %64 = vector.broadcast %41 : vector<1x64xf32> to vector<8x64xf32>
    %65 = arith.addf %63, %64 : vector<8x64xf32>
    %cst_20 = arith.constant 0.00999999977 : f32
    %66 = vector.broadcast %cst_20 : f32 to vector<8x64xf32>
    %67 = arith.mulf %66, %65 : vector<8x64xf32>
    %68 = arith.maximumf %65, %67 : vector<8x64xf32>
    %c80 = arith.constant 80 : index
    %c0_21 = arith.constant 0 : index
    %69 = vector.load %arg1[%c80, %c0_21] : memref<1152x256xbf16, #tpu.memory_space<vmem>>, vector<64x128xbf16>
    %70 = arith.truncf %68 : vector<8x64xf32> to vector<8x64xbf16>
    %cst_22 = arith.constant dense<0.000000e+00> : vector<8x128xf32>
    %71 = tpu.matmul %70, %69, %cst_22 {dimension_numbers = #tpu.dot_dimension_numbers<[1], [0], [0], [1], [0, 0, 1, 1], [], []>} : vector<8x64xbf16>, vector<64x128xbf16>, vector<8x128xf32> -> vector<8x128xf32>
    %c144 = arith.constant 144 : index
    %c0_23 = arith.constant 0 : index
    %72 = vector.load %arg1[%c144, %c0_23] : memref<1152x256xbf16, #tpu.memory_space<vmem>>, vector<2x128xbf16>
    %73 = arith.extf %72 : vector<2x128xbf16> to vector<2x128xf32>
    %74 = vector.extract_strided_slice %73 {offsets = [0, 0], sizes = [1, 128], strides = [1, 1]} : vector<2x128xf32> to vector<1x128xf32>
    %75 = vector.extract_strided_slice %73 {offsets = [1, 0], sizes = [1, 128], strides = [1, 1]} : vector<2x128xf32> to vector<1x128xf32>
    %cst_24 = arith.constant dense<0.000000e+00> : vector<128xf32>
    %76 = vector.multi_reduction <add>, %71, %cst_24 [0] : vector<8x128xf32> to vector<128xf32>
    %77 = vector.shape_cast %76 : vector<128xf32> to vector<1x128xf32>
    %cst_25 = arith.constant 8.000000e+00 : f32
    %78 = vector.broadcast %cst_25 : f32 to vector<1x128xf32>
    %79 = arith.divf %77, %78 : vector<1x128xf32>
    %80 = arith.mulf %71, %71 : vector<8x128xf32>
    %cst_26 = arith.constant dense<0.000000e+00> : vector<128xf32>
    %81 = vector.multi_reduction <add>, %80, %cst_26 [0] : vector<8x128xf32> to vector<128xf32>
    %82 = vector.shape_cast %81 : vector<128xf32> to vector<1x128xf32>
    %cst_27 = arith.constant 8.000000e+00 : f32
    %83 = vector.broadcast %cst_27 : f32 to vector<1x128xf32>
    %84 = arith.divf %82, %83 : vector<1x128xf32>
    %85 = arith.mulf %79, %79 : vector<1x128xf32>
    %86 = arith.subf %84, %85 : vector<1x128xf32>
    %cst_28 = arith.constant 0.000000e+00 : f32
    %87 = vector.broadcast %cst_28 : f32 to vector<1x128xf32>
    %88 = arith.maximumf %86, %87 : vector<1x128xf32>
    %89 = vector.broadcast %79 : vector<1x128xf32> to vector<8x128xf32>
    %90 = arith.subf %71, %89 : vector<8x128xf32>
    %cst_29 = arith.constant 9.99999974E-6 : f32
    %91 = vector.broadcast %cst_29 : f32 to vector<1x128xf32>
    %92 = arith.addf %88, %91 : vector<1x128xf32>
    %93 = math.rsqrt %92 : vector<1x128xf32>
    %94 = vector.broadcast %93 : vector<1x128xf32> to vector<8x128xf32>
    %95 = arith.mulf %90, %94 : vector<8x128xf32>
    %96 = vector.broadcast %74 : vector<1x128xf32> to vector<8x128xf32>
    %97 = arith.mulf %95, %96 : vector<8x128xf32>
    %98 = vector.broadcast %75 : vector<1x128xf32> to vector<8x128xf32>
    %99 = arith.addf %97, %98 : vector<8x128xf32>
    %cst_30 = arith.constant 0.00999999977 : f32
    %100 = vector.broadcast %cst_30 : f32 to vector<8x128xf32>
    %101 = arith.mulf %100, %99 : vector<8x128xf32>
    %102 = arith.maximumf %99, %101 : vector<8x128xf32>
    %c160 = arith.constant 160 : index
    %c0_31 = arith.constant 0 : index
    %103 = vector.load %arg1[%c160, %c0_31] : memref<1152x256xbf16, #tpu.memory_space<vmem>>, vector<128x256xbf16>
    %104 = arith.truncf %102 : vector<8x128xf32> to vector<8x128xbf16>
    %cst_32 = arith.constant dense<0.000000e+00> : vector<8x256xf32>
    %105 = tpu.matmul %104, %103, %cst_32 {dimension_numbers = #tpu.dot_dimension_numbers<[1], [0], [0], [1], [0, 0, 1, 1], [], []>} : vector<8x128xbf16>, vector<128x256xbf16>, vector<8x256xf32> -> vector<8x256xf32>
    %c288 = arith.constant 288 : index
    %c0_33 = arith.constant 0 : index
    %106 = vector.load %arg1[%c288, %c0_33] : memref<1152x256xbf16, #tpu.memory_space<vmem>>, vector<2x256xbf16>
    %107 = arith.extf %106 : vector<2x256xbf16> to vector<2x256xf32>
    %108 = vector.extract_strided_slice %107 {offsets = [0, 0], sizes = [1, 256], strides = [1, 1]} : vector<2x256xf32> to vector<1x256xf32>
    %109 = vector.extract_strided_slice %107 {offsets = [1, 0], sizes = [1, 256], strides = [1, 1]} : vector<2x256xf32> to vector<1x256xf32>
    %cst_34 = arith.constant dense<0.000000e+00> : vector<256xf32>
    %110 = vector.multi_reduction <add>, %105, %cst_34 [0] : vector<8x256xf32> to vector<256xf32>
    %111 = vector.shape_cast %110 : vector<256xf32> to vector<1x256xf32>
    %cst_35 = arith.constant 8.000000e+00 : f32
    %112 = vector.broadcast %cst_35 : f32 to vector<1x256xf32>
    %113 = arith.divf %111, %112 : vector<1x256xf32>
    %114 = arith.mulf %105, %105 : vector<8x256xf32>
    %cst_36 = arith.constant dense<0.000000e+00> : vector<256xf32>
    %115 = vector.multi_reduction <add>, %114, %cst_36 [0] : vector<8x256xf32> to vector<256xf32>
    %116 = vector.shape_cast %115 : vector<256xf32> to vector<1x256xf32>
    %cst_37 = arith.constant 8.000000e+00 : f32
    %117 = vector.broadcast %cst_37 : f32 to vector<1x256xf32>
    %118 = arith.divf %116, %117 : vector<1x256xf32>
    %119 = arith.mulf %113, %113 : vector<1x256xf32>
    %120 = arith.subf %118, %119 : vector<1x256xf32>
    %cst_38 = arith.constant 0.000000e+00 : f32
    %121 = vector.broadcast %cst_38 : f32 to vector<1x256xf32>
    %122 = arith.maximumf %120, %121 : vector<1x256xf32>
    %123 = vector.broadcast %113 : vector<1x256xf32> to vector<8x256xf32>
    %124 = arith.subf %105, %123 : vector<8x256xf32>
    %cst_39 = arith.constant 9.99999974E-6 : f32
    %125 = vector.broadcast %cst_39 : f32 to vector<1x256xf32>
    %126 = arith.addf %122, %125 : vector<1x256xf32>
    %127 = math.rsqrt %126 : vector<1x256xf32>
    %128 = vector.broadcast %127 : vector<1x256xf32> to vector<8x256xf32>
    %129 = arith.mulf %124, %128 : vector<8x256xf32>
    %130 = vector.broadcast %108 : vector<1x256xf32> to vector<8x256xf32>
    %131 = arith.mulf %129, %130 : vector<8x256xf32>
    %132 = vector.broadcast %109 : vector<1x256xf32> to vector<8x256xf32>
    %133 = arith.addf %131, %132 : vector<8x256xf32>
    %cst_40 = arith.constant 0.00999999977 : f32
    %134 = vector.broadcast %cst_40 : f32 to vector<8x256xf32>
    %135 = arith.mulf %134, %133 : vector<8x256xf32>
    %136 = arith.maximumf %133, %135 : vector<8x256xf32>
    %c560 = arith.constant 560 : index
    %c0_41 = arith.constant 0 : index
    %137 = vector.load %arg1[%c560, %c0_41] : memref<1152x256xbf16, #tpu.memory_space<vmem>>, vector<1x8xbf16>
    %138 = arith.extf %137 : vector<1x8xbf16> to vector<1x8xf32>
    %c304 = arith.constant 304 : index
    %c0_42 = arith.constant 0 : index
    %139 = vector.load %arg1[%c304, %c0_42] : memref<1152x256xbf16, #tpu.memory_space<vmem>>, vector<256x8xbf16>
    %140 = arith.truncf %136 : vector<8x256xf32> to vector<8x256xbf16>
    %cst_43 = arith.constant dense<0.000000e+00> : vector<8x8xf32>
    %141 = tpu.matmul %140, %139, %cst_43 {dimension_numbers = #tpu.dot_dimension_numbers<[1], [0], [0], [1], [0, 0, 1, 1], [], []>} : vector<8x256xbf16>, vector<256x8xbf16>, vector<8x8xf32> -> vector<8x8xf32>
    %142 = vector.broadcast %138 : vector<1x8xf32> to vector<8x8xf32>
    %143 = arith.addf %141, %142 : vector<8x8xf32>
    %c592 = arith.constant 592 : index
    %c0_44 = arith.constant 0 : index
    %144 = vector.load %arg1[%c592, %c0_44] : memref<1152x256xbf16, #tpu.memory_space<vmem>>, vector<1x256xbf16>
    %145 = arith.extf %144 : vector<1x256xbf16> to vector<1x256xf32>
    %c576 = arith.constant 576 : index
    %c0_45 = arith.constant 0 : index
    %146 = vector.load %arg1[%c576, %c0_45] : memref<1152x256xbf16, #tpu.memory_space<vmem>>, vector<8x256xbf16>
    %147 = arith.truncf %143 : vector<8x8xf32> to vector<8x8xbf16>
    %cst_46 = arith.constant dense<0.000000e+00> : vector<8x256xf32>
    %148 = tpu.matmul %147, %146, %cst_46 {dimension_numbers = #tpu.dot_dimension_numbers<[1], [0], [0], [1], [0, 0, 1, 1], [], []>} : vector<8x8xbf16>, vector<8x256xbf16>, vector<8x256xf32> -> vector<8x256xf32>
    %149 = vector.broadcast %145 : vector<1x256xf32> to vector<8x256xf32>
    %150 = arith.addf %148, %149 : vector<8x256xf32>
    %c608 = arith.constant 608 : index
    %c0_47 = arith.constant 0 : index
    %151 = vector.load %arg1[%c608, %c0_47] : memref<1152x256xbf16, #tpu.memory_space<vmem>>, vector<256x128xbf16>
    %152 = arith.truncf %150 : vector<8x256xf32> to vector<8x256xbf16>
    %cst_48 = arith.constant dense<0.000000e+00> : vector<8x128xf32>
    %153 = tpu.matmul %152, %151, %cst_48 {dimension_numbers = #tpu.dot_dimension_numbers<[1], [0], [0], [1], [0, 0, 1, 1], [], []>} : vector<8x256xbf16>, vector<256x128xbf16>, vector<8x128xf32> -> vector<8x128xf32>
    %c864 = arith.constant 864 : index
    %c0_49 = arith.constant 0 : index
    %154 = vector.load %arg1[%c864, %c0_49] : memref<1152x256xbf16, #tpu.memory_space<vmem>>, vector<2x128xbf16>
    %155 = arith.extf %154 : vector<2x128xbf16> to vector<2x128xf32>
    %156 = vector.extract_strided_slice %155 {offsets = [0, 0], sizes = [1, 128], strides = [1, 1]} : vector<2x128xf32> to vector<1x128xf32>
    %157 = vector.extract_strided_slice %155 {offsets = [1, 0], sizes = [1, 128], strides = [1, 1]} : vector<2x128xf32> to vector<1x128xf32>
    %cst_50 = arith.constant dense<0.000000e+00> : vector<128xf32>
    %158 = vector.multi_reduction <add>, %153, %cst_50 [0] : vector<8x128xf32> to vector<128xf32>
    %159 = vector.shape_cast %158 : vector<128xf32> to vector<1x128xf32>
    %cst_51 = arith.constant 8.000000e+00 : f32
    %160 = vector.broadcast %cst_51 : f32 to vector<1x128xf32>
    %161 = arith.divf %159, %160 : vector<1x128xf32>
    %162 = arith.mulf %153, %153 : vector<8x128xf32>
    %cst_52 = arith.constant dense<0.000000e+00> : vector<128xf32>
    %163 = vector.multi_reduction <add>, %162, %cst_52 [0] : vector<8x128xf32> to vector<128xf32>
    %164 = vector.shape_cast %163 : vector<128xf32> to vector<1x128xf32>
    %cst_53 = arith.constant 8.000000e+00 : f32
    %165 = vector.broadcast %cst_53 : f32 to vector<1x128xf32>
    %166 = arith.divf %164, %165 : vector<1x128xf32>
    %167 = arith.mulf %161, %161 : vector<1x128xf32>
    %168 = arith.subf %166, %167 : vector<1x128xf32>
    %cst_54 = arith.constant 0.000000e+00 : f32
    %169 = vector.broadcast %cst_54 : f32 to vector<1x128xf32>
    %170 = arith.maximumf %168, %169 : vector<1x128xf32>
    %171 = vector.broadcast %161 : vector<1x128xf32> to vector<8x128xf32>
    %172 = arith.subf %153, %171 : vector<8x128xf32>
    %cst_55 = arith.constant 9.99999974E-6 : f32
    %173 = vector.broadcast %cst_55 : f32 to vector<1x128xf32>
    %174 = arith.addf %170, %173 : vector<1x128xf32>
    %175 = math.rsqrt %174 : vector<1x128xf32>
    %176 = vector.broadcast %175 : vector<1x128xf32> to vector<8x128xf32>
    %177 = arith.mulf %172, %176 : vector<8x128xf32>
    %178 = vector.broadcast %156 : vector<1x128xf32> to vector<8x128xf32>
    %179 = arith.mulf %177, %178 : vector<8x128xf32>
    %180 = vector.broadcast %157 : vector<1x128xf32> to vector<8x128xf32>
    %181 = arith.addf %179, %180 : vector<8x128xf32>
    %cst_56 = arith.constant 0.00999999977 : f32
    %182 = vector.broadcast %cst_56 : f32 to vector<8x128xf32>
    %183 = arith.mulf %182, %181 : vector<8x128xf32>
    %184 = arith.maximumf %181, %183 : vector<8x128xf32>
    %c880 = arith.constant 880 : index
    %c0_57 = arith.constant 0 : index
    %185 = vector.load %arg1[%c880, %c0_57] : memref<1152x256xbf16, #tpu.memory_space<vmem>>, vector<128x64xbf16>
    %186 = arith.truncf %184 : vector<8x128xf32> to vector<8x128xbf16>
    %cst_58 = arith.constant dense<0.000000e+00> : vector<8x64xf32>
    %187 = tpu.matmul %186, %185, %cst_58 {dimension_numbers = #tpu.dot_dimension_numbers<[1], [0], [0], [1], [0, 0, 1, 1], [], []>} : vector<8x128xbf16>, vector<128x64xbf16>, vector<8x64xf32> -> vector<8x64xf32>
    %c1008 = arith.constant 1008 : index
    %c0_59 = arith.constant 0 : index
    %188 = vector.load %arg1[%c1008, %c0_59] : memref<1152x256xbf16, #tpu.memory_space<vmem>>, vector<2x64xbf16>
    %189 = arith.extf %188 : vector<2x64xbf16> to vector<2x64xf32>
    %190 = vector.extract_strided_slice %189 {offsets = [0, 0], sizes = [1, 64], strides = [1, 1]} : vector<2x64xf32> to vector<1x64xf32>
    %191 = vector.extract_strided_slice %189 {offsets = [1, 0], sizes = [1, 64], strides = [1, 1]} : vector<2x64xf32> to vector<1x64xf32>
    %cst_60 = arith.constant dense<0.000000e+00> : vector<64xf32>
    %192 = vector.multi_reduction <add>, %187, %cst_60 [0] : vector<8x64xf32> to vector<64xf32>
    %193 = vector.shape_cast %192 : vector<64xf32> to vector<1x64xf32>
    %cst_61 = arith.constant 8.000000e+00 : f32
    %194 = vector.broadcast %cst_61 : f32 to vector<1x64xf32>
    %195 = arith.divf %193, %194 : vector<1x64xf32>
    %196 = arith.mulf %187, %187 : vector<8x64xf32>
    %cst_62 = arith.constant dense<0.000000e+00> : vector<64xf32>
    %197 = vector.multi_reduction <add>, %196, %cst_62 [0] : vector<8x64xf32> to vector<64xf32>
    %198 = vector.shape_cast %197 : vector<64xf32> to vector<1x64xf32>
    %cst_63 = arith.constant 8.000000e+00 : f32
    %199 = vector.broadcast %cst_63 : f32 to vector<1x64xf32>
    %200 = arith.divf %198, %199 : vector<1x64xf32>
    %201 = arith.mulf %195, %195 : vector<1x64xf32>
    %202 = arith.subf %200, %201 : vector<1x64xf32>
    %cst_64 = arith.constant 0.000000e+00 : f32
    %203 = vector.broadcast %cst_64 : f32 to vector<1x64xf32>
    %204 = arith.maximumf %202, %203 : vector<1x64xf32>
    %205 = vector.broadcast %195 : vector<1x64xf32> to vector<8x64xf32>
    %206 = arith.subf %187, %205 : vector<8x64xf32>
    %cst_65 = arith.constant 9.99999974E-6 : f32
    %207 = vector.broadcast %cst_65 : f32 to vector<1x64xf32>
    %208 = arith.addf %204, %207 : vector<1x64xf32>
    %209 = math.rsqrt %208 : vector<1x64xf32>
    %210 = vector.broadcast %209 : vector<1x64xf32> to vector<8x64xf32>
    %211 = arith.mulf %206, %210 : vector<8x64xf32>
    %212 = vector.broadcast %190 : vector<1x64xf32> to vector<8x64xf32>
    %213 = arith.mulf %211, %212 : vector<8x64xf32>
    %214 = vector.broadcast %191 : vector<1x64xf32> to vector<8x64xf32>
    %215 = arith.addf %213, %214 : vector<8x64xf32>
    %cst_66 = arith.constant 0.00999999977 : f32
    %216 = vector.broadcast %cst_66 : f32 to vector<8x64xf32>
    %217 = arith.mulf %216, %215 : vector<8x64xf32>
    %218 = arith.maximumf %215, %217 : vector<8x64xf32>
    %c1024 = arith.constant 1024 : index
    %c0_67 = arith.constant 0 : index
    %219 = vector.load %arg1[%c1024, %c0_67] : memref<1152x256xbf16, #tpu.memory_space<vmem>>, vector<64x32xbf16>
    %220 = arith.truncf %218 : vector<8x64xf32> to vector<8x64xbf16>
    %cst_68 = arith.constant dense<0.000000e+00> : vector<8x32xf32>
    %221 = tpu.matmul %220, %219, %cst_68 {dimension_numbers = #tpu.dot_dimension_numbers<[1], [0], [0], [1], [0, 0, 1, 1], [], []>} : vector<8x64xbf16>, vector<64x32xbf16>, vector<8x32xf32> -> vector<8x32xf32>
    %c1088 = arith.constant 1088 : index
    %c0_69 = arith.constant 0 : index
    %222 = vector.load %arg1[%c1088, %c0_69] : memref<1152x256xbf16, #tpu.memory_space<vmem>>, vector<2x32xbf16>
    %223 = arith.extf %222 : vector<2x32xbf16> to vector<2x32xf32>
    %224 = vector.extract_strided_slice %223 {offsets = [0, 0], sizes = [1, 32], strides = [1, 1]} : vector<2x32xf32> to vector<1x32xf32>
    %225 = vector.extract_strided_slice %223 {offsets = [1, 0], sizes = [1, 32], strides = [1, 1]} : vector<2x32xf32> to vector<1x32xf32>
    %cst_70 = arith.constant dense<0.000000e+00> : vector<32xf32>
    %226 = vector.multi_reduction <add>, %221, %cst_70 [0] : vector<8x32xf32> to vector<32xf32>
    %227 = vector.shape_cast %226 : vector<32xf32> to vector<1x32xf32>
    %cst_71 = arith.constant 8.000000e+00 : f32
    %228 = vector.broadcast %cst_71 : f32 to vector<1x32xf32>
    %229 = arith.divf %227, %228 : vector<1x32xf32>
    %230 = arith.mulf %221, %221 : vector<8x32xf32>
    %cst_72 = arith.constant dense<0.000000e+00> : vector<32xf32>
    %231 = vector.multi_reduction <add>, %230, %cst_72 [0] : vector<8x32xf32> to vector<32xf32>
    %232 = vector.shape_cast %231 : vector<32xf32> to vector<1x32xf32>
    %cst_73 = arith.constant 8.000000e+00 : f32
    %233 = vector.broadcast %cst_73 : f32 to vector<1x32xf32>
    %234 = arith.divf %232, %233 : vector<1x32xf32>
    %235 = arith.mulf %229, %229 : vector<1x32xf32>
    %236 = arith.subf %234, %235 : vector<1x32xf32>
    %cst_74 = arith.constant 0.000000e+00 : f32
    %237 = vector.broadcast %cst_74 : f32 to vector<1x32xf32>
    %238 = arith.maximumf %236, %237 : vector<1x32xf32>
    %239 = vector.broadcast %229 : vector<1x32xf32> to vector<8x32xf32>
    %240 = arith.subf %221, %239 : vector<8x32xf32>
    %cst_75 = arith.constant 9.99999974E-6 : f32
    %241 = vector.broadcast %cst_75 : f32 to vector<1x32xf32>
    %242 = arith.addf %238, %241 : vector<1x32xf32>
    %243 = math.rsqrt %242 : vector<1x32xf32>
    %244 = vector.broadcast %243 : vector<1x32xf32> to vector<8x32xf32>
    %245 = arith.mulf %240, %244 : vector<8x32xf32>
    %246 = vector.broadcast %224 : vector<1x32xf32> to vector<8x32xf32>
    %247 = arith.mulf %245, %246 : vector<8x32xf32>
    %248 = vector.broadcast %225 : vector<1x32xf32> to vector<8x32xf32>
    %249 = arith.addf %247, %248 : vector<8x32xf32>
    %cst_76 = arith.constant 0.00999999977 : f32
    %250 = vector.broadcast %cst_76 : f32 to vector<8x32xf32>
    %251 = arith.mulf %250, %249 : vector<8x32xf32>
    %252 = arith.maximumf %249, %251 : vector<8x32xf32>
    %c1136 = arith.constant 1136 : index
    %c0_77 = arith.constant 0 : index
    %253 = vector.load %arg1[%c1136, %c0_77] : memref<1152x256xbf16, #tpu.memory_space<vmem>>, vector<1x16xbf16>
    %254 = arith.extf %253 : vector<1x16xbf16> to vector<1x16xf32>
    %c1104 = arith.constant 1104 : index
    %c0_78 = arith.constant 0 : index
    %255 = vector.load %arg1[%c1104, %c0_78] : memref<1152x256xbf16, #tpu.memory_space<vmem>>, vector<32x16xbf16>
    %256 = arith.truncf %252 : vector<8x32xf32> to vector<8x32xbf16>
    %cst_79 = arith.constant dense<0.000000e+00> : vector<8x16xf32>
    %257 = tpu.matmul %256, %255, %cst_79 {dimension_numbers = #tpu.dot_dimension_numbers<[1], [0], [0], [1], [0, 0, 1, 1], [], []>} : vector<8x32xbf16>, vector<32x16xbf16>, vector<8x16xf32> -> vector<8x16xf32>
    %258 = vector.broadcast %254 : vector<1x16xf32> to vector<8x16xf32>
    %259 = arith.addf %257, %258 : vector<8x16xf32>
    %cst_80 = arith.constant 5.000000e-01 : f32
    %260 = vector.broadcast %cst_80 : f32 to vector<8x16xf32>
    %261 = arith.mulf %260, %259 : vector<8x16xf32>
    %262 = math.tanh %261 : vector<8x16xf32>
    %cst_81 = arith.constant 1.000000e+00 : f32
    %263 = vector.broadcast %cst_81 : f32 to vector<8x16xf32>
    %264 = arith.addf %262, %263 : vector<8x16xf32>
    %cst_82 = arith.constant 5.000000e-01 : f32
    %265 = vector.broadcast %cst_82 : f32 to vector<8x16xf32>
    %266 = arith.mulf %265, %264 : vector<8x16xf32>
    %cst_83 = arith.constant 0.000000e+00 : f32
    %267 = vector.broadcast %cst_83 : f32 to vector<8x128xf32>
    %c0_84 = arith.constant 0 : index
    %c0_85 = arith.constant 0 : index
    %268 = vector.load %arg2[%c0_84, %c0_85] : memref<8x128xf32, #tpu.memory_space<vmem>>, vector<8x128xf32>
    tpu.vector_store %arg2[%c0_84, %c0_85], %267 {strides = array<i32>} : memref<8x128xf32, #tpu.memory_space<vmem>>, vector<8x128xf32>,
    %c0_86 = arith.constant 0 : index
    %c0_87 = arith.constant 0 : index
    %269 = vector.load %arg2[%c0_86, %c0_87] : memref<8x128xf32, #tpu.memory_space<vmem>>, vector<8x16xf32>
    tpu.vector_store %arg2[%c0_86, %c0_87], %266 {strides = array<i32>} : memref<8x128xf32, #tpu.memory_space<vmem>>, vector<8x16xf32>,
    %c0_88 = arith.constant 0 : index
    %c16_89 = arith.constant 16 : index
    %270 = vector.load %arg2[%c0_88, %c16_89] : memref<8x128xf32, #tpu.memory_space<vmem>>, vector<8x8xf32>
    tpu.vector_store %arg2[%c0_88, %c16_89], %143 {strides = array<i32>} : memref<8x128xf32, #tpu.memory_space<vmem>>, vector<8x8xf32>,
    return
  }
}

</mosaic_0001>

<llo_original>
// kernel: fwd.1
$region0: #{fwd.1}
  #allocation0 [shape = 'u32[]', space=smem, size = 0x4, offset = 0x4, fixed_abs, tag = 'smem constant byte address 0x4 - core index']
  #allocation1 [shape = 'u32[144,128]{1,0:T(1,128)}', space=vmem, size = 0x12000, scoped, tag = 'internal scratch']
  %s0 = inlined_call_operand.hbm [shape: f32[8,16], index: 0, kind: input, shape index: {}]
  %s1 = inlined_call_operand.hbm [shape: bf16[1152,256], index: 1, kind: input, shape index: {}]
  %s2 = inlined_call_operand.vmem [shape: f32[8,128], index: 2, kind: output, shape index: {}]
  %s3 = sld [smem:[#allocation0]]
  $region26: #{fwd.1} parent=0
    _
  %s5 = ssub.s32 1, %s3
  %s6 = scalar_select 0, %s5, %s3
  $region1: #{fwd.1} parent=0
    #allocation2 [shape = 'u8[4096]{0}', space=vmem, size = 0x1000, scoped, tag = 'input window, operand 0, single buffered']
    #allocation3 [shape = 's32[1]{0}', space=sflag, size = 0x4, scoped, tag = 'scoped memory for fwd.1']
    #allocation4 [shape = 'u8[589824]{0}', space=vmem, size = 0x90000, scoped, tag = 'input window, operand 1, single buffered']
    #allocation5 [shape = 's32[1]{0}', space=sflag, size = 0x4, scoped, tag = 'scoped memory for fwd.1']
    %7 = vsyncpa [#allocation3], 0
    %8 = vsyncpa [#allocation5], 0
    // Predicated region
    $region2: #{fwd.1} parent=1 // pred_check
      _
    $region3: #{fwd.1} parent=1 // pred_check_branch
      %10 = sbr.rel (0) target = $region5
    $region4: #{fwd.1} parent=1 // pred_region
      %s12 = ssub.s32 128, 128
      %13 = vsyncadd [#allocation3], %s12
      %s15 = sshll.u32 [#allocation2], 4
      %s16 = int_to_ptr.vmem [resolvable:$true] %s15
      %18 = dma.hbm_to_vmem [thread:$0]  %s0, 128, %s16, [#allocation3]
    $region5: #{fwd.1} parent=1 // pred_fallthru
      _
    // Predicated region
    $region6: #{fwd.1} parent=1 // pred_check
      _
    $region7: #{fwd.1} parent=1 // pred_check_branch
      %20 = sbr.rel (0) target = $region9
    $region8: #{fwd.1} parent=1 // pred_region
      %s22 = ssub.s32 18432, 18432
      %23 = vsyncadd [#allocation5], %s22
      %s24 = sshll.u32 [#allocation4], 4
      %s25 = int_to_ptr.vmem [resolvable:$true] %s24
      %30 = dma.hbm_to_vmem [thread:$0]  %s1, 18432, %s25, [#allocation5], 128, 128, 8
    $region9: #{fwd.1} parent=1 // pred_fallthru
      _
    // Predicated region
    $region10: #{fwd.1} parent=1 // pred_check
      _
    $region11: #{fwd.1} parent=1 // pred_check_branch
      %32 = sbr.rel (0) target = $region13
    $region12: #{fwd.1} parent=1 // pred_region
      %33 = dma.done [#allocation3], 128
    $region13: #{fwd.1} parent=1 // pred_fallthru
      _
    // Predicated region
    $region14: #{fwd.1} parent=1 // pred_check
      _
    $region15: #{fwd.1} parent=1 // pred_check_branch
      %35 = sbr.rel (0) target = $region17
    $region16: #{fwd.1} parent=1 // pred_region
      %36 = dma.done [#allocation5], 18432
    $region17: #{fwd.1} parent=1 // pred_fallthru
      _
    %v38 = vld [vmem:[#allocation2] sm:$0xff]
    %v39 = vld [vmem:[#allocation4] sm:$0xf]
    %v40 = vld [vmem:[#allocation4 + $0x8] sm:$0xf]
    %v41 = vpack.c.bf16 %v38, %v38
    %v44 = vunpack.c.l.b16 %v39
    %v45 = vunpack.c.l.b16 %v40
    %v46 = vpack.c.b16 %v45, %v44
    %vm48 = vcmask 130048
    %v50 = vsel %vm48, %v41, 0
    %52 = vmatprep.subr.bf16.mxu0 0
    %53 = vmatpush1.bf16.msra.mxu0 0
    %54 = vmatprep.subr.bf16.mxu0 0
    %55 = vmatpush1.bf16.msra.mxu0 0
    %56 = vmatprep.subr.bf16.mxu0 0
    %57 = vmatpush1.bf16.msra.mxu0 0
    %58 = vmatprep.subr.bf16.mxu0 0
    %59 = vmatpush1.bf16.msra.mxu0 0
    %60 = vmatprep.subr.bf16.mxu0 0
    %61 = vmatpush1.bf16.msra.mxu0 0
    %62 = vmatprep.subr.bf16.mxu0 0
    %63 = vmatpush1.bf16.msra.mxu0 0
    %64 = vmatprep.subr.bf16.mxu0 0
    %65 = vmatpush1.bf16.msra.mxu0 0
    %66 = vmatprep.subr.bf16.mxu0 0
    %67 = vmatpush1.bf16.msra.mxu0 %v46
    %68 = vmatprep.subr.bf16.mxu0 0
    %69 = vmatpush2.bf16.msra.mxu0 0
    %70 = vmatprep.subr.bf16.mxu0 0
    %71 = vmatpush2.bf16.msra.mxu0 0
    %72 = vmatprep.subr.bf16.mxu0 0
    %73 = vmatpush2.bf16.msra.mxu0 0
    %74 = vmatprep.subr.bf16.mxu0 0
    %75 = vmatpush2.bf16.msra.mxu0 0
    %76 = vmatprep.subr.bf16.mxu0 0
    %77 = vmatpush2.bf16.msra.mxu0 0
    %78 = vmatprep.subr.bf16.mxu0 0
    %79 = vmatpush2.bf16.msra.mxu0 0
    %80 = vmatprep.subr.bf16.mxu0 0
    %81 = vmatpush2.bf16.msra.mxu0 0
    %82 = vmatprep.subr.bf16.mxu0 0
    %83 = vmatpush2.bf16.msra.mxu0 0
    %84 = vmatprep.mubr.bf16.mxu0 0
    %85 = vmatmul.mubr.bf16.gmra.mxu0 %v50
    %v86 = vpop.f32.mrf.mxu0
    %v87 = vadd.f32 0.0, %v86
    %v88 = vpop.f32.mrf.mxu0
    %v89 = vpop.f32.mrf.mxu0
    %v90 = vpop.f32.mrf.mxu0
    %91 = vdwg.mxu0
    %v92 = vld [vmem:[#allocation4 + $0x10] sm:$0x1]
    %v93 = vunpack.c.l.bf16 %v92
    %vm94 = vcmask 261120
    %v95 = vsel %vm94, %v87, 0.0
    %v96 = vrot.slane %v95, 4
    %v97 = vadd.f32 %v95, %v96
    %v98 = vrot.slane %v97, 2
    %v99 = vadd.f32 %v97, %v98
    %v100 = vrot.slane %v99, 1
    %v101 = vadd.f32 %v99, %v100
    %v102 = vrcp.pop 8.0
    %v103 = vmul.f32 %v101, %v102
    %v104 = vmul.f32 %v87, %v87
    %v105 = vsel %vm94, %v104, 0.0
    %v106 = vrot.slane %v105, 4
    %v107 = vadd.f32 %v105, %v106
    %v108 = vrot.slane %v107, 2
    %v109 = vadd.f32 %v107, %v108
    %v110 = vrot.slane %v109, 1
    %v111 = vadd.f32 %v109, %v110
    %v112 = vmul.f32 %v111, %v102
    %v113 = vmul.f32 %v103, %v103
    %v114 = vsub.f32 %v112, %v113
    %v115 = vmax.f32 %v114, 0.0
    %v116 = vsub.f32 %v87, %v103
    %v117 = vadd.f32 %v115, 1e-05
    %v118 = vrsqrt.pop %v117
    %v119 = vmul.f32 %v116, %v118
    %v120 = vlaneseq
    %v121 = vshrl.u32 %v120, 7
    %v122 = vsub.s32 0, %v121
    %v123 = vrot.slane %v93, %v122
    %v124 = vmul.f32 %v119, %v123
    %v125 = vlaneseq
    %v126 = vshrl.u32 %v125, 7
    %v127 = vsub.s32 1, %v126
    %v128 = vrot.slane %v93, %v127
    %v129 = vadd.f32 %v124, %v128
    %v130 = vmul.f32 %v129, 0.01
    %v131 = vmax.f32 %v129, %v130
    %v132 = vld [vmem:[#allocation4 + $0x20] sm:$0xf]
    %v133 = vld [vmem:[#allocation4 + $0x28] sm:$0xf]
    %v134 = vld [vmem:[#allocation4 + $0x30] sm:$0xf]
    %v135 = vld [vmem:[#allocation4 + $0x38] sm:$0xf]
    %v136 = vpack.c.bf16 %v131, %v131
    %v141 = vunpack.c.l.b16 %v132
    %v142 = vunpack.c.l.b16 %v133
    %v143 = vunpack.c.l.b16 %v134
    %v144 = vunpack.c.l.b16 %v135
    %v145 = vpack.c.b16 %v142, %v141
    %v146 = vpack.c.b16 %v144, %v143
    %v150 = vsel %vm94, %v136, 0
    %152 = vmatprep.subr.bf16.mxu0 0
    %153 = vmatpush1.bf16.msra.mxu0 0
    %154 = vmatprep.subr.bf16.mxu0 0
    %155 = vmatpush1.bf16.msra.mxu0 0
    %156 = vmatprep.subr.bf16.mxu0 0
    %157 = vmatpush1.bf16.msra.mxu0 0
    %158 = vmatprep.subr.bf16.mxu0 0
    %159 = vmatpush1.bf16.msra.mxu0 0
    %160 = vmatprep.subr.bf16.mxu0 0
    %161 = vmatpush1.bf16.msra.mxu0 0
    %162 = vmatprep.subr.bf16.mxu0 0
    %163 = vmatpush1.bf16.msra.mxu0 0
    %164 = vmatprep.subr.bf16.mxu0 0
    %165 = vmatpush1.bf16.msra.mxu0 %v146
    %166 = vmatprep.subr.bf16.mxu0 0
    %167 = vmatpush1.bf16.msra.mxu0 %v145
    %168 = vmatprep.subr.bf16.mxu0 0
    %169 = vmatpush2.bf16.msra.mxu0 0
    %170 = vmatprep.subr.bf16.mxu0 0
    %171 = vmatpush2.bf16.msra.mxu0 0
    %172 = vmatprep.subr.bf16.mxu0 0
    %173 = vmatpush2.bf16.msra.mxu0 0
    %174 = vmatprep.subr.bf16.mxu0 0
    %175 = vmatpush2.bf16.msra.mxu0 0
    %176 = vmatprep.subr.bf16.mxu0 0
    %177 = vmatpush2.bf16.msra.mxu0 0
    %178 = vmatprep.subr.bf16.mxu0 0
    %179 = vmatpush2.bf16.msra.mxu0 0
    %180 = vmatprep.subr.bf16.mxu0 0
    %181 = vmatpush2.bf16.msra.mxu0 0
    %182 = vmatprep.subr.bf16.mxu0 0
    %183 = vmatpush2.bf16.msra.mxu0 0
    %184 = vmatprep.mubr.bf16.mxu0 0
    %185 = vmatmul.mubr.bf16.gmra.mxu0 %v150
    %v186 = vpop.f32.mrf.mxu0
    %v187 = vadd.f32 0.0, %v186
    %v188 = vpop.f32.mrf.mxu0
    %v189 = vpop.f32.mrf.mxu0
    %v190 = vpop.f32.mrf.mxu0
    %191 = vdwg.mxu0
    %v192 = vld [vmem:[#allocation4 + $0x40] sm:$0x1]
    %v193 = vunpack.c.l.bf16 %v192
    %vm194 = vcmask 523264
    %v195 = vsel %vm194, %v187, 0.0
    %v196 = vrot.slane %v195, 4
    %v197 = vadd.f32 %v195, %v196
    %v198 = vrot.slane %v197, 2
    %v199 = vadd.f32 %v197, %v198
    %v200 = vrot.slane %v199, 1
    %v201 = vadd.f32 %v199, %v200
    %v202 = vmul.f32 %v201, %v102
    %v203 = vmul.f32 %v187, %v187
    %v204 = vsel %vm194, %v203, 0.0
    %v205 = vrot.slane %v204, 4
    %v206 = vadd.f32 %v204, %v205
    %v207 = vrot.slane %v206, 2
    %v208 = vadd.f32 %v206, %v207
    %v209 = vrot.slane %v208, 1
    %v210 = vadd.f32 %v208, %v209
    %v211 = vmul.f32 %v210, %v102
    %v212 = vmul.f32 %v202, %v202
    %v213 = vsub.f32 %v211, %v212
    %v214 = vmax.f32 %v213, 0.0
    %v215 = vsub.f32 %v187, %v202
    %v216 = vadd.f32 %v214, 1e-05
    %v217 = vrsqrt.pop %v216
    %v218 = vmul.f32 %v215, %v217
    %v219 = vlaneseq
    %v220 = vshrl.u32 %v219, 7
    %v221 = vsub.s32 0, %v220
    %v222 = vrot.slane %v193, %v221
    %v223 = vmul.f32 %v218, %v222
    %v224 = vlaneseq
    %v225 = vshrl.u32 %v224, 7
    %v226 = vsub.s32 1, %v225
    %v227 = vrot.slane %v193, %v226
    %v228 = vadd.f32 %v223, %v227
    %v229 = vmul.f32 %v228, 0.01
    %v230 = vmax.f32 %v228, %v229
    %v231 = vld [vmem:[#allocation4 + $0x50] sm:$0xf]
    %v232 = vld [vmem:[#allocation4 + $0x58] sm:$0xf]
    %v233 = vld [vmem:[#allocation4 + $0x60] sm:$0xf]
    %v234 = vld [vmem:[#allocation4 + $0x68] sm:$0xf]
    %v235 = vld [vmem:[#allocation4 + $0x70] sm:$0xf]
    %v236 = vld [vmem:[#allocation4 + $0x78] sm:$0xf]
    %v237 = vld [vmem:[#allocation4 + $0x80] sm:$0xf]
    %v238 = vld [vmem:[#allocation4 + $0x88] sm:$0xf]
    %v239 = vpack.c.bf16 %v230, %v230
    %v248 = vunpack.c.l.b16 %v231
    %v249 = vunpack.c.l.b16 %v232
    %v250 = vunpack.c.l.b16 %v233
    %v251 = vunpack.c.l.b16 %v234
    %v252 = vunpack.c.l.b16 %v235
    %v253 = vunpack.c.l.b16 %v236
    %v254 = vunpack.c.l.b16 %v237
    %v255 = vunpack.c.l.b16 %v238
    %v256 = vpack.c.b16 %v249, %v248
    %v257 = vpack.c.b16 %v251, %v250
    %v258 = vpack.c.b16 %v253, %v252
    %v259 = vpack.c.b16 %v255, %v254
    %v265 = vsel %vm194, %v239, 0
    %267 = vmatprep.subr.bf16.mxu0 0
    %268 = vmatpush1.bf16.msra.mxu0 0
    %269 = vmatprep.subr.bf16.mxu0 0
    %270 = vmatpush1.bf16.msra.mxu0 0
    %271 = vmatprep.subr.bf16.mxu0 0
    %272 = vmatpush1.bf16.msra.mxu0 0
    %273 = vmatprep.subr.bf16.mxu0 0
    %274 = vmatpush1.bf16.msra.mxu0 0
    %275 = vmatprep.subr.bf16.mxu0 0
    %276 = vmatpush1.bf16.msra.mxu0 %v259
    %277 = vmatprep.subr.bf16.mxu0 0
    %278 = vmatpush1.bf16.msra.mxu0 %v258
    %279 = vmatprep.subr.bf16.mxu0 0
    %280 = vmatpush1.bf16.msra.mxu0 %v257
    %281 = vmatprep.subr.bf16.mxu0 0
    %282 = vmatpush1.bf16.msra.mxu0 %v256
    %283 = vmatprep.subr.bf16.mxu0 0
    %284 = vmatpush2.bf16.msra.mxu0 0
    %285 = vmatprep.subr.bf16.mxu0 0
    %286 = vmatpush2.bf16.msra.mxu0 0
    %287 = vmatprep.subr.bf16.mxu0 0
    %288 = vmatpush2.bf16.msra.mxu0 0
    %289 = vmatprep.subr.bf16.mxu0 0
    %290 = vmatpush2.bf16.msra.mxu0 0
    %291 = vmatprep.subr.bf16.mxu0 0
    %292 = vmatpush2.bf16.msra.mxu0 0
    %293 = vmatprep.subr.bf16.mxu0 0
    %294 = vmatpush2.bf16.msra.mxu0 0
    %295 = vmatprep.subr.bf16.mxu0 0
    %296 = vmatpush2.bf16.msra.mxu0 0
    %297 = vmatprep.subr.bf16.mxu0 0
    %298 = vmatpush2.bf16.msra.mxu0 0
    %299 = vmatprep.mubr.bf16.mxu0 0
    %300 = vmatmul.mubr.bf16.gmra.mxu0 %v265
    %v301 = vpop.f32.mrf.mxu0
    %v302 = vadd.f32 0.0, %v301
    %v303 = vpop.f32.mrf.mxu0
    %v304 = vpop.f32.mrf.mxu0
    %v305 = vpop.f32.mrf.mxu0
    %306 = vdwg.mxu0
    %v307 = vld [vmem:[#allocation4 + $0x90] sm:$0x1]
    %v308 = vunpack.c.l.bf16 %v307
    %v309 = vrot.slane %v302, 4
    %v310 = vadd.f32 %v302, %v309
    %v311 = vrot.slane %v310, 2
    %v312 = vadd.f32 %v310, %v311
    %v313 = vrot.slane %v312, 1
    %v314 = vadd.f32 %v312, %v313
    %v315 = vmul.f32 %v314, %v102
    %v316 = vmul.f32 %v302, %v302
    %v317 = vrot.slane %v316, 4
    %v318 = vadd.f32 %v316, %v317
    %v319 = vrot.slane %v318, 2
    %v320 = vadd.f32 %v318, %v319
    %v321 = vrot.slane %v320, 1
    %v322 = vadd.f32 %v320, %v321
    %v323 = vmul.f32 %v322, %v102
    %v324 = vmul.f32 %v315, %v315
    %v325 = vsub.f32 %v323, %v324
    %v326 = vmax.f32 %v325, 0.0
    %v327 = vsub.f32 %v302, %v315
    %v328 = vadd.f32 %v326, 1e-05
    %v329 = vrsqrt.pop %v328
    %v330 = vmul.f32 %v327, %v329
    %v331 = vlaneseq
    %v332 = vshrl.u32 %v331, 7
    %v333 = vsub.s32 0, %v332
    %v334 = vrot.slane %v308, %v333
    %v335 = vmul.f32 %v330, %v334
    %v336 = vlaneseq
    %v337 = vshrl.u32 %v336, 7
    %v338 = vsub.s32 1, %v337
    %v339 = vrot.slane %v308, %v338
    %v340 = vadd.f32 %v335, %v339
    %v341 = vmul.f32 %v340, 0.01
    %v342 = vmax.f32 %v340, %v341
    %v343 = vld [vmem:[#allocation4 + $0xa0] sm:$0xff]
    %v344 = vld [vmem:[#allocation4 + $0xa8] sm:$0xff]
    %v345 = vld [vmem:[#allocation4 + $0xb0] sm:$0xff]
    %v346 = vld [vmem:[#allocation4 + $0xb8] sm:$0xff]
    %v347 = vld [vmem:[#allocation4 + $0xc0] sm:$0xff]
    %v348 = vld [vmem:[#allocation4 + $0xc8] sm:$0xff]
    %v349 = vld [vmem:[#allocation4 + $0xd0] sm:$0xff]
    %v350 = vld [vmem:[#allocation4 + $0xd8] sm:$0xff]
    %v351 = vld [vmem:[#allocation4 + $0xe0] sm:$0xff]
    %v352 = vld [vmem:[#allocation4 + $0xe8] sm:$0xff]
    %v353 = vld [vmem:[#allocation4 + $0xf0] sm:$0xff]
    %v354 = vld [vmem:[#allocation4 + $0xf8] sm:$0xff]
    %v355 = vld [vmem:[#allocation4 + $0x100] sm:$0xff]
    %v356 = vld [vmem:[#allocation4 + $0x108] sm:$0xff]
    %v357 = vld [vmem:[#allocation4 + $0x110] sm:$0xff]
    %v358 = vld [vmem:[#allocation4 + $0x118] sm:$0xff]
    %v359 = vpack.c.bf16 %v342, %v342
    %v376 = vunpack.c.l.b16 %v343
    %v377 = vunpack.c.h.b16 %v343
    %v378 = vunpack.c.l.b16 %v344
    %v379 = vunpack.c.h.b16 %v344
    %v380 = vunpack.c.l.b16 %v345
    %v381 = vunpack.c.h.b16 %v345
    %v382 = vunpack.c.l.b16 %v346
    %v383 = vunpack.c.h.b16 %v346
    %v384 = vunpack.c.l.b16 %v347
    %v385 = vunpack.c.h.b16 %v347
    %v386 = vunpack.c.l.b16 %v348
    %v387 = vunpack.c.h.b16 %v348
    %v388 = vunpack.c.l.b16 %v349
    %v389 = vunpack.c.h.b16 %v349
    %v390 = vunpack.c.l.b16 %v350
    %v391 = vunpack.c.h.b16 %v350
    %v392 = vunpack.c.l.b16 %v351
    %v393 = vunpack.c.h.b16 %v351
    %v394 = vunpack.c.l.b16 %v352
    %v395 = vunpack.c.h.b16 %v352
    %v396 = vunpack.c.l.b16 %v353
    %v397 = vunpack.c.h.b16 %v353
    %v398 = vunpack.c.l.b16 %v354
    %v399 = vunpack.c.h.b16 %v354
    %v400 = vunpack.c.l.b16 %v355
    %v401 = vunpack.c.h.b16 %v355
    %v402 = vunpack.c.l.b16 %v356
    %v403 = vunpack.c.h.b16 %v356
    %v404 = vunpack.c.l.b16 %v357
    %v405 = vunpack.c.h.b16 %v357
    %v406 = vunpack.c.l.b16 %v358
    %v407 = vunpack.c.h.b16 %v358
    %v408 = vpack.c.b16 %v378, %v376
    %v409 = vpack.c.b16 %v379, %v377
    %v410 = vpack.c.b16 %v382, %v380
    %v411 = vpack.c.b16 %v383, %v381
    %v412 = vpack.c.b16 %v386, %v384
    %v413 = vpack.c.b16 %v387, %v385
    %v414 = vpack.c.b16 %v390, %v388
    %v415 = vpack.c.b16 %v391, %v389
    %v416 = vpack.c.b16 %v394, %v392
    %v417 = vpack.c.b16 %v395, %v393
    %v418 = vpack.c.b16 %v398, %v396
    %v419 = vpack.c.b16 %v399, %v397
    %v420 = vpack.c.b16 %v402, %v400
    %v421 = vpack.c.b16 %v403, %v401
    %v422 = vpack.c.b16 %v406, %v404
    %v423 = vpack.c.b16 %v407, %v405
    %440 = vmatprep.subr.bf16.mxu0 %v423
    %441 = vmatpush1.bf16.msra.mxu0 %v422
    %442 = vmatprep.subr.bf16.mxu0 %v421
    %443 = vmatpush1.bf16.msra.mxu0 %v420
    %444 = vmatprep.subr.bf16.mxu0 %v419
    %445 = vmatpush1.bf16.msra.mxu0 %v418
    %446 = vmatprep.subr.bf16.mxu0 %v417
    %447 = vmatpush1.bf16.msra.mxu0 %v416
    %448 = vmatprep.subr.bf16.mxu0 %v415
    %449 = vmatpush1.bf16.msra.mxu0 %v414
    %450 = vmatprep.subr.bf16.mxu0 %v413
    %451 = vmatpush1.bf16.msra.mxu0 %v412
    %452 = vmatprep.subr.bf16.mxu0 %v411
    %453 = vmatpush1.bf16.msra.mxu0 %v410
    %454 = vmatprep.subr.bf16.mxu0 %v409
    %455 = vmatpush1.bf16.msra.mxu0 %v408
    %456 = vmatprep.subr.bf16.mxu0 0
    %457 = vmatpush2.bf16.msra.mxu0 0
    %458 = vmatprep.subr.bf16.mxu0 0
    %459 = vmatpush2.bf16.msra.mxu0 0
    %460 = vmatprep.subr.bf16.mxu0 0
    %461 = vmatpush2.bf16.msra.mxu0 0
    %462 = vmatprep.subr.bf16.mxu0 0
    %463 = vmatpush2.bf16.msra.mxu0 0
    %464 = vmatprep.subr.bf16.mxu0 0
    %465 = vmatpush2.bf16.msra.mxu0 0
    %466 = vmatprep.subr.bf16.mxu0 0
    %467 = vmatpush2.bf16.msra.mxu0 0
    %468 = vmatprep.subr.bf16.mxu0 0
    %469 = vmatpush2.bf16.msra.mxu0 0
    %470 = vmatprep.subr.bf16.mxu0 0
    %471 = vmatpush2.bf16.msra.mxu0 0
    %472 = vmatprep.mubr.bf16.mxu0 0
    %473 = vmatmul.mubr.bf16.gmra.mxu0 %v359
    %v474 = vpop.f32.mrf.mxu0
    %v475 = vadd.f32 0.0, %v474
    %v476 = vpop.f32.mrf.mxu0
    %v477 = vadd.f32 0.0, %v476
    %v478 = vpop.f32.mrf.mxu0
    %v479 = vpop.f32.mrf.mxu0
    %480 = vdwg.mxu0
    %v481 = vld [vmem:[#allocation4 + $0x120] sm:$0x11]
    %v482 = vunpack.c.l.bf16 %v481
    %v483 = vunpack.c.h.bf16 %v481
    %v484 = vrot.slane %v475, 4
    %v485 = vadd.f32 %v475, %v484
    %v486 = vrot.slane %v485, 2
    %v487 = vadd.f32 %v485, %v486
    %v488 = vrot.slane %v487, 1
    %v489 = vadd.f32 %v487, %v488
    %v490 = vrot.slane %v477, 4
    %v491 = vadd.f32 %v477, %v490
    %v492 = vrot.slane %v491, 2
    %v493 = vadd.f32 %v491, %v492
    %v494 = vrot.slane %v493, 1
    %v495 = vadd.f32 %v493, %v494
    %v496 = vmul.f32 %v489, %v102
    %v497 = vmul.f32 %v495, %v102
    %v498 = vmul.f32 %v475, %v475
    %v499 = vmul.f32 %v477, %v477
    %v500 = vrot.slane %v498, 4
    %v501 = vadd.f32 %v498, %v500
    %v502 = vrot.slane %v501, 2
    %v503 = vadd.f32 %v501, %v502
    %v504 = vrot.slane %v503, 1
    %v505 = vadd.f32 %v503, %v504
    %v506 = vrot.slane %v499, 4
    %v507 = vadd.f32 %v499, %v506
    %v508 = vrot.slane %v507, 2
    %v509 = vadd.f32 %v507, %v508
    %v510 = vrot.slane %v509, 1
    %v511 = vadd.f32 %v509, %v510
    %v512 = vmul.f32 %v505, %v102
    %v513 = vmul.f32 %v511, %v102
    %v514 = vmul.f32 %v496, %v496
    %v515 = vmul.f32 %v497, %v497
    %v516 = vsub.f32 %v512, %v514
    %v517 = vsub.f32 %v513, %v515
    %v518 = vmax.f32 %v516, 0.0
    %v519 = vmax.f32 %v517, 0.0
    %v520 = vsub.f32 %v475, %v496
    %v521 = vsub.f32 %v477, %v497
    %v522 = vadd.f32 %v518, 1e-05
    %v523 = vadd.f32 %v519, 1e-05
    %v524 = vrsqrt.pop %v522
    %v525 = vrsqrt.pop %v523
    %v526 = vmul.f32 %v520, %v524
    %v527 = vmul.f32 %v521, %v525
    %v528 = vlaneseq
    %v529 = vshrl.u32 %v528, 7
    %v530 = vsub.s32 0, %v529
    %v531 = vrot.slane %v482, %v530
    %v532 = vlaneseq
    %v533 = vshrl.u32 %v532, 7
    %v534 = vsub.s32 0, %v533
    %v535 = vrot.slane %v483, %v534
    %v536 = vmul.f32 %v526, %v531
    %v537 = vmul.f32 %v527, %v535
    %v538 = vlaneseq
    %v539 = vshrl.u32 %v538, 7
    %v540 = vsub.s32 1, %v539
    %v541 = vrot.slane %v482, %v540
    %v542 = vlaneseq
    %v543 = vshrl.u32 %v542, 7
    %v544 = vsub.s32 1, %v543
    %v545 = vrot.slane %v483, %v544
    %v546 = vadd.f32 %v536, %v541
    %v547 = vadd.f32 %v537, %v545
    %v548 = vmul.f32 %v546, 0.01
    %v549 = vmul.f32 %v547, 0.01
    %v550 = vmax.f32 %v546, %v548
    %v551 = vmax.f32 %v547, %v549
    %v552 = vld [vmem:[#allocation4 + $0x230] sm:$0x1]
    %v553 = vunpack.c.l.bf16 %v552
    %v554 = vld [vmem:[#allocation4 + $0x130] sm:$0xf]
    %v555 = vld [vmem:[#allocation4 + $0x138] sm:$0xf]
    %v556 = vld [vmem:[#allocation4 + $0x140] sm:$0xf]
    %v557 = vld [vmem:[#allocation4 + $0x148] sm:$0xf]
    %v558 = vld [vmem:[#allocation4 + $0x150] sm:$0xf]
    %v559 = vld [vmem:[#allocation4 + $0x158] sm:$0xf]
    %v560 = vld [vmem:[#allocation4 + $0x160] sm:$0xf]
    %v561 = vld [vmem:[#allocation4 + $0x168] sm:$0xf]
    %v562 = vld [vmem:[#allocation4 + $0x170] sm:$0xf]
    %v563 = vld [vmem:[#allocation4 + $0x178] sm:$0xf]
    %v564 = vld [vmem:[#allocation4 + $0x180] sm:$0xf]
    %v565 = vld [vmem:[#allocation4 + $0x188] sm:$0xf]
    %v566 = vld [vmem:[#allocation4 + $0x190] sm:$0xf]
    %v567 = vld [vmem:[#allocation4 + $0x198] sm:$0xf]
    %v568 = vld [vmem:[#allocation4 + $0x1a0] sm:$0xf]
    %v569 = vld [vmem:[#allocation4 + $0x1a8] sm:$0xf]
    %v570 = vld [vmem:[#allocation4 + $0x1b0] sm:$0xf]
    %v571 = vld [vmem:[#allocation4 + $0x1b8] sm:$0xf]
    %v572 = vld [vmem:[#allocation4 + $0x1c0] sm:$0xf]
    %v573 = vld [vmem:[#allocation4 + $0x1c8] sm:$0xf]
    %v574 = vld [vmem:[#allocation4 + $0x1d0] sm:$0xf]
    %v575 = vld [vmem:[#allocation4 + $0x1d8] sm:$0xf]
    %v576 = vld [vmem:[#allocation4 + $0x1e0] sm:$0xf]
    %v577 = vld [vmem:[#allocation4 + $0x1e8] sm:$0xf]
    %v578 = vld [vmem:[#allocation4 + $0x1f0] sm:$0xf]
    %v579 = vld [vmem:[#allocation4 + $0x1f8] sm:$0xf]
    %v580 = vld [vmem:[#allocation4 + $0x200] sm:$0xf]
    %v581 = vld [vmem:[#allocation4 + $0x208] sm:$0xf]
    %v582 = vld [vmem:[#allocation4 + $0x210] sm:$0xf]
    %v583 = vld [vmem:[#allocation4 + $0x218] sm:$0xf]
    %v584 = vld [vmem:[#allocation4 + $0x220] sm:$0xf]
    %v585 = vld [vmem:[#allocation4 + $0x228] sm:$0xf]
    %v586 = vpack.c.bf16 %v550, %v550
    %v587 = vpack.c.bf16 %v551, %v551
    %v588 = vlaneseq
    %v589 = vshrl.u32 %v588, 7
    %v590 = vsub.s32 0, %v589
    %v591 = vrot.slane %v553, %v590
    %v624 = vunpack.c.l.b16 %v554
    %v625 = vunpack.c.l.b16 %v555
    %v626 = vunpack.c.l.b16 %v556
    %v627 = vunpack.c.l.b16 %v557
    %v628 = vunpack.c.l.b16 %v558
    %v629 = vunpack.c.l.b16 %v559
    %v630 = vunpack.c.l.b16 %v560
    %v631 = vunpack.c.l.b16 %v561
    %v632 = vunpack.c.l.b16 %v562
    %v633 = vunpack.c.l.b16 %v563
    %v634 = vunpack.c.l.b16 %v564
    %v635 = vunpack.c.l.b16 %v565
    %v636 = vunpack.c.l.b16 %v566
    %v637 = vunpack.c.l.b16 %v567
    %v638 = vunpack.c.l.b16 %v568
    %v639 = vunpack.c.l.b16 %v569
    %v640 = vunpack.c.l.b16 %v570
    %v641 = vunpack.c.l.b16 %v571
    %v642 = vunpack.c.l.b16 %v572
    %v643 = vunpack.c.l.b16 %v573
    %v644 = vunpack.c.l.b16 %v574
    %v645 = vunpack.c.l.b16 %v575
    %v646 = vunpack.c.l.b16 %v576
    %v647 = vunpack.c.l.b16 %v577
    %v648 = vunpack.c.l.b16 %v578
    %v649 = vunpack.c.l.b16 %v579
    %v650 = vunpack.c.l.b16 %v580
    %v651 = vunpack.c.l.b16 %v581
    %v652 = vunpack.c.l.b16 %v582
    %v653 = vunpack.c.l.b16 %v583
    %v654 = vunpack.c.l.b16 %v584
    %v655 = vunpack.c.l.b16 %v585
    %v656 = vpack.c.b16 %v625, %v624
    %v657 = vpack.c.b16 %v627, %v626
    %v658 = vpack.c.b16 %v629, %v628
    %v659 = vpack.c.b16 %v631, %v630
    %v660 = vpack.c.b16 %v633, %v632
    %v661 = vpack.c.b16 %v635, %v634
    %v662 = vpack.c.b16 %v637, %v636
    %v663 = vpack.c.b16 %v639, %v638
    %v664 = vpack.c.b16 %v641, %v640
    %v665 = vpack.c.b16 %v643, %v642
    %v666 = vpack.c.b16 %v645, %v644
    %v667 = vpack.c.b16 %v647, %v646
    %v668 = vpack.c.b16 %v649, %v648
    %v669 = vpack.c.b16 %v651, %v650
    %v670 = vpack.c.b16 %v653, %v652
    %v671 = vpack.c.b16 %v655, %v654
    %688 = vmatprep.subr.bf16.mxu0 0
    %689 = vmatpush1.bf16.msra.mxu0 %v663
    %690 = vmatprep.subr.bf16.mxu0 0
    %691 = vmatpush1.bf16.msra.mxu0 %v662
    %692 = vmatprep.subr.bf16.mxu0 0
    %693 = vmatpush1.bf16.msra.mxu0 %v661
    %694 = vmatprep.subr.bf16.mxu0 0
    %695 = vmatpush1.bf16.msra.mxu0 %v660
    %696 = vmatprep.subr.bf16.mxu0 0
    %697 = vmatpush1.bf16.msra.mxu0 %v659
    %698 = vmatprep.subr.bf16.mxu0 0
    %699 = vmatpush1.bf16.msra.mxu0 %v658
    %700 = vmatprep.subr.bf16.mxu0 0
    %701 = vmatpush1.bf16.msra.mxu0 %v657
    %702 = vmatprep.subr.bf16.mxu0 0
    %703 = vmatpush1.bf16.msra.mxu0 %v656
    %704 = vmatprep.subr.bf16.mxu0 0
    %705 = vmatpush2.bf16.msra.mxu0 %v671
    %706 = vmatprep.subr.bf16.mxu0 0
    %707 = vmatpush2.bf16.msra.mxu0 %v670
    %708 = vmatprep.subr.bf16.mxu0 0
    %709 = vmatpush2.bf16.msra.mxu0 %v669
    %710 = vmatprep.subr.bf16.mxu0 0
    %711 = vmatpush2.bf16.msra.mxu0 %v668
    %712 = vmatprep.subr.bf16.mxu0 0
    %713 = vmatpush2.bf16.msra.mxu0 %v667
    %714 = vmatprep.subr.bf16.mxu0 0
    %715 = vmatpush2.bf16.msra.mxu0 %v666
    %716 = vmatprep.subr.bf16.mxu0 0
    %717 = vmatpush2.bf16.msra.mxu0 %v665
    %718 = vmatprep.subr.bf16.mxu0 0
    %719 = vmatpush2.bf16.msra.mxu0 %v664
    %720 = vmatprep.mubr.bf16.mxu0 %v587
    %721 = vmatmul.mubr.bf16.gmra.mxu0 %v586
    %v722 = vpop.f32.mrf.mxu0
    %v723 = vadd.f32 %v591, %v722
    %v724 = vpop.f32.mrf.mxu0
    %v725 = vpop.f32.mrf.mxu0
    %v726 = vpop.f32.mrf.mxu0
    %727 = vdwg.mxu0
    %v728 = vld [vmem:[#allocation4 + $0x250] sm:$0x11]
    %v729 = vunpack.c.l.bf16 %v728
    %v730 = vunpack.c.h.bf16 %v728
    %v731 = vld [vmem:[#allocation4 + $0x240] sm:$0xff]
    %v732 = vpack.c.bf16 %v723, %v723
    %v733 = vlaneseq
    %v734 = vshrl.u32 %v733, 7
    %v735 = vsub.s32 0, %v734
    %v736 = vrot.slane %v729, %v735
    %v737 = vlaneseq
    %v738 = vshrl.u32 %v737, 7
    %v739 = vsub.s32 0, %v738
    %v740 = vrot.slane %v730, %v739
    %v742 = vunpack.c.l.b16 %v731
    %v743 = vunpack.c.h.b16 %v731
    %v744 = vpack.c.b16 %v742, %v742
    %v745 = vpack.c.b16 %v743, %v743
    %vm746 = vcmask 64512
    %v748 = vsel %vm746, %v732, 0
    %vm750 = vcmask 1043456
    %v752 = vsel %vm750, %v744, 0
    %v755 = vsel %vm750, %v745, 0
    %757 = vmatprep.subr.bf16.mxu0 0
    %758 = vmatpush1.bf16.msra.mxu0 0
    %759 = vmatprep.subr.bf16.mxu0 0
    %760 = vmatpush1.bf16.msra.mxu0 0
    %761 = vmatprep.subr.bf16.mxu0 0
    %762 = vmatpush1.bf16.msra.mxu0 0
    %763 = vmatprep.subr.bf16.mxu0 0
    %764 = vmatpush1.bf16.msra.mxu0 0
    %765 = vmatprep.subr.bf16.mxu0 0
    %766 = vmatpush1.bf16.msra.mxu0 0
    %767 = vmatprep.subr.bf16.mxu0 0
    %768 = vmatpush1.bf16.msra.mxu0 0
    %769 = vmatprep.subr.bf16.mxu0 0
    %770 = vmatpush1.bf16.msra.mxu0 0
    %771 = vmatprep.subr.bf16.mxu0 %v755
    %772 = vmatpush1.bf16.msra.mxu0 %v752
    %773 = vmatprep.subr.bf16.mxu0 0
    %774 = vmatpush2.bf16.msra.mxu0 0
    %775 = vmatprep.subr.bf16.mxu0 0
    %776 = vmatpush2.bf16.msra.mxu0 0
    %777 = vmatprep.subr.bf16.mxu0 0
    %778 = vmatpush2.bf16.msra.mxu0 0
    %779 = vmatprep.subr.bf16.mxu0 0
    %780 = vmatpush2.bf16.msra.mxu0 0
    %781 = vmatprep.subr.bf16.mxu0 0
    %782 = vmatpush2.bf16.msra.mxu0 0
    %783 = vmatprep.subr.bf16.mxu0 0
    %784 = vmatpush2.bf16.msra.mxu0 0
    %785 = vmatprep.subr.bf16.mxu0 0
    %786 = vmatpush2.bf16.msra.mxu0 0
    %787 = vmatprep.subr.bf16.mxu0 0
    %788 = vmatpush2.bf16.msra.mxu0 0
    %789 = vmatprep.mubr.bf16.mxu0 0
    %790 = vmatmul.mubr.bf16.gmra.mxu0 %v748
    %v791 = vpop.f32.mrf.mxu0
    %v792 = vadd.f32 %v736, %v791
    %v793 = vpop.f32.mrf.mxu0
    %v794 = vadd.f32 %v740, %v793
    %v795 = vpop.f32.mrf.mxu0
    %v796 = vpop.f32.mrf.mxu0
    %797 = vdwg.mxu0
    %v798 = vld [vmem:[#allocation4 + $0x260] sm:$0xf]
    %v799 = vld [vmem:[#allocation4 + $0x268] sm:$0xf]
    %v800 = vld [vmem:[#allocation4 + $0x270] sm:$0xf]
    %v801 = vld [vmem:[#allocation4 + $0x278] sm:$0xf]
    %v802 = vld [vmem:[#allocation4 + $0x280] sm:$0xf]
    %v803 = vld [vmem:[#allocation4 + $0x288] sm:$0xf]
    %v804 = vld [vmem:[#allocation4 + $0x290] sm:$0xf]
    %v805 = vld [vmem:[#allocation4 + $0x298] sm:$0xf]
    %v806 = vld [vmem:[#allocation4 + $0x2a0] sm:$0xf]
    %v807 = vld [vmem:[#allocation4 + $0x2a8] sm:$0xf]
    %v808 = vld [vmem:[#allocation4 + $0x2b0] sm:$0xf]
    %v809 = vld [vmem:[#allocation4 + $0x2b8] sm:$0xf]
    %v810 = vld [vmem:[#allocation4 + $0x2c0] sm:$0xf]
    %v811 = vld [vmem:[#allocation4 + $0x2c8] sm:$0xf]
    %v812 = vld [vmem:[#allocation4 + $0x2d0] sm:$0xf]
    %v813 = vld [vmem:[#allocation4 + $0x2d8] sm:$0xf]
    %v814 = vld [vmem:[#allocation4 + $0x2e0] sm:$0xf]
    %v815 = vld [vmem:[#allocation4 + $0x2e8] sm:$0xf]
    %v816 = vld [vmem:[#allocation4 + $0x2f0] sm:$0xf]
    %v817 = vld [vmem:[#allocation4 + $0x2f8] sm:$0xf]
    %v818 = vld [vmem:[#allocation4 + $0x300] sm:$0xf]
    %v819 = vld [vmem:[#allocation4 + $0x308] sm:$0xf]
    %v820 = vld [vmem:[#allocation4 + $0x310] sm:$0xf]
    %v821 = vld [vmem:[#allocation4 + $0x318] sm:$0xf]
    %v822 = vld [vmem:[#allocation4 + $0x320] sm:$0xf]
    %v823 = vld [vmem:[#allocation4 + $0x328] sm:$0xf]
    %v824 = vld [vmem:[#allocation4 + $0x330] sm:$0xf]
    %v825 = vld [vmem:[#allocation4 + $0x338] sm:$0xf]
    %v826 = vld [vmem:[#allocation4 + $0x340] sm:$0xf]
    %v827 = vld [vmem:[#allocation4 + $0x348] sm:$0xf]
    %v828 = vld [vmem:[#allocation4 + $0x350] sm:$0xf]
    %v829 = vld [vmem:[#allocation4 + $0x358] sm:$0xf]
    %v830 = vpack.c.bf16 %v792, %v792
    %v831 = vpack.c.bf16 %v794, %v794
    %v864 = vunpack.c.l.b16 %v798
    %v865 = vunpack.c.l.b16 %v799
    %v866 = vunpack.c.l.b16 %v800
    %v867 = vunpack.c.l.b16 %v801
    %v868 = vunpack.c.l.b16 %v802
    %v869 = vunpack.c.l.b16 %v803
    %v870 = vunpack.c.l.b16 %v804
    %v871 = vunpack.c.l.b16 %v805
    %v872 = vunpack.c.l.b16 %v806
    %v873 = vunpack.c.l.b16 %v807
    %v874 = vunpack.c.l.b16 %v808
    %v875 = vunpack.c.l.b16 %v809
    %v876 = vunpack.c.l.b16 %v810
    %v877 = vunpack.c.l.b16 %v811
    %v878 = vunpack.c.l.b16 %v812
    %v879 = vunpack.c.l.b16 %v813
    %v880 = vunpack.c.l.b16 %v814
    %v881 = vunpack.c.l.b16 %v815
    %v882 = vunpack.c.l.b16 %v816
    %v883 = vunpack.c.l.b16 %v817
    %v884 = vunpack.c.l.b16 %v818
    %v885 = vunpack.c.l.b16 %v819
    %v886 = vunpack.c.l.b16 %v820
    %v887 = vunpack.c.l.b16 %v821
    %v888 = vunpack.c.l.b16 %v822
    %v889 = vunpack.c.l.b16 %v823
    %v890 = vunpack.c.l.b16 %v824
    %v891 = vunpack.c.l.b16 %v825
    %v892 = vunpack.c.l.b16 %v826
    %v893 = vunpack.c.l.b16 %v827
    %v894 = vunpack.c.l.b16 %v828
    %v895 = vunpack.c.l.b16 %v829
    %v896 = vpack.c.b16 %v865, %v864
    %v897 = vpack.c.b16 %v867, %v866
    %v898 = vpack.c.b16 %v869, %v868
    %v899 = vpack.c.b16 %v871, %v870
    %v900 = vpack.c.b16 %v873, %v872
    %v901 = vpack.c.b16 %v875, %v874
    %v902 = vpack.c.b16 %v877, %v876
    %v903 = vpack.c.b16 %v879, %v878
    %v904 = vpack.c.b16 %v881, %v880
    %v905 = vpack.c.b16 %v883, %v882
    %v906 = vpack.c.b16 %v885, %v884
    %v907 = vpack.c.b16 %v887, %v886
    %v908 = vpack.c.b16 %v889, %v888
    %v909 = vpack.c.b16 %v891, %v890
    %v910 = vpack.c.b16 %v893, %v892
    %v911 = vpack.c.b16 %v895, %v894
    %928 = vmatprep.subr.bf16.mxu0 0
    %929 = vmatpush1.bf16.msra.mxu0 %v903
    %930 = vmatprep.subr.bf16.mxu0 0
    %931 = vmatpush1.bf16.msra.mxu0 %v902
    %932 = vmatprep.subr.bf16.mxu0 0
    %933 = vmatpush1.bf16.msra.mxu0 %v901
    %934 = vmatprep.subr.bf16.mxu0 0
    %935 = vmatpush1.bf16.msra.mxu0 %v900
    %936 = vmatprep.subr.bf16.mxu0 0
    %937 = vmatpush1.bf16.msra.mxu0 %v899
    %938 = vmatprep.subr.bf16.mxu0 0
    %939 = vmatpush1.bf16.msra.mxu0 %v898
    %940 = vmatprep.subr.bf16.mxu0 0
    %941 = vmatpush1.bf16.msra.mxu0 %v897
    %942 = vmatprep.subr.bf16.mxu0 0
    %943 = vmatpush1.bf16.msra.mxu0 %v896
    %944 = vmatprep.subr.bf16.mxu0 0
    %945 = vmatpush2.bf16.msra.mxu0 %v911
    %946 = vmatprep.subr.bf16.mxu0 0
    %947 = vmatpush2.bf16.msra.mxu0 %v910
    %948 = vmatprep.subr.bf16.mxu0 0
    %949 = vmatpush2.bf16.msra.mxu0 %v909
    %950 = vmatprep.subr.bf16.mxu0 0
    %951 = vmatpush2.bf16.msra.mxu0 %v908
    %952 = vmatprep.subr.bf16.mxu0 0
    %953 = vmatpush2.bf16.msra.mxu0 %v907
    %954 = vmatprep.subr.bf16.mxu0 0
    %955 = vmatpush2.bf16.msra.mxu0 %v906
    %956 = vmatprep.subr.bf16.mxu0 0
    %957 = vmatpush2.bf16.msra.mxu0 %v905
    %958 = vmatprep.subr.bf16.mxu0 0
    %959 = vmatpush2.bf16.msra.mxu0 %v904
    %960 = vmatprep.mubr.bf16.mxu0 %v831
    %961 = vmatmul.mubr.bf16.gmra.mxu0 %v830
    %v962 = vpop.f32.mrf.mxu0
    %v963 = vadd.f32 0.0, %v962
    %v964 = vpop.f32.mrf.mxu0
    %v965 = vpop.f32.mrf.mxu0
    %v966 = vpop.f32.mrf.mxu0
    %967 = vdwg.mxu0
    %v968 = vld [vmem:[#allocation4 + $0x360] sm:$0x1]
    %v969 = vunpack.c.l.bf16 %v968
    %v970 = vrot.slane %v963, 4
    %v971 = vadd.f32 %v963, %v970
    %v972 = vrot.slane %v971, 2
    %v973 = vadd.f32 %v971, %v972
    %v974 = vrot.slane %v973, 1
    %v975 = vadd.f32 %v973, %v974
    %v976 = vmul.f32 %v975, %v102
    %v977 = vmul.f32 %v963, %v963
    %v978 = vrot.slane %v977, 4
    %v979 = vadd.f32 %v977, %v978
    %v980 = vrot.slane %v979, 2
    %v981 = vadd.f32 %v979, %v980
    %v982 = vrot.slane %v981, 1
    %v983 = vadd.f32 %v981, %v982
    %v984 = vmul.f32 %v983, %v102
    %v985 = vmul.f32 %v976, %v976
    %v986 = vsub.f32 %v984, %v985
    %v987 = vmax.f32 %v986, 0.0
    %v988 = vsub.f32 %v963, %v976
    %v989 = vadd.f32 %v987, 1e-05
    %v990 = vrsqrt.pop %v989
    %v991 = vmul.f32 %v988, %v990
    %v992 = vlaneseq
    %v993 = vshrl.u32 %v992, 7
    %v994 = vsub.s32 0, %v993
    %v995 = vrot.slane %v969, %v994
    %v996 = vmul.f32 %v991, %v995
    %v997 = vlaneseq
    %v998 = vshrl.u32 %v997, 7
    %v999 = vsub.s32 1, %v998
    %v1000 = vrot.slane %v969, %v999
    %v1001 = vadd.f32 %v996, %v1000
    %v1002 = vmul.f32 %v1001, 0.01
    %v1003 = vmax.f32 %v1001, %v1002
    %v1004 = vld [vmem:[#allocation4 + $0x370] sm:$0xf]
    %v1005 = vld [vmem:[#allocation4 + $0x378] sm:$0xf]
    %v1006 = vld [vmem:[#allocation4 + $0x380] sm:$0xf]
    %v1007 = vld [vmem:[#allocation4 + $0x388] sm:$0xf]
    %v1008 = vld [vmem:[#allocation4 + $0x390] sm:$0xf]
    %v1009 = vld [vmem:[#allocation4 + $0x398] sm:$0xf]
    %v1010 = vld [vmem:[#allocation4 + $0x3a0] sm:$0xf]
    %v1011 = vld [vmem:[#allocation4 + $0x3a8] sm:$0xf]
    %v1012 = vld [vmem:[#allocation4 + $0x3b0] sm:$0xf]
    %v1013 = vld [vmem:[#allocation4 + $0x3b8] sm:$0xf]
    %v1014 = vld [vmem:[#allocation4 + $0x3c0] sm:$0xf]
    %v1015 = vld [vmem:[#allocation4 + $0x3c8] sm:$0xf]
    %v1016 = vld [vmem:[#allocation4 + $0x3d0] sm:$0xf]
    %v1017 = vld [vmem:[#allocation4 + $0x3d8] sm:$0xf]
    %v1018 = vld [vmem:[#allocation4 + $0x3e0] sm:$0xf]
    %v1019 = vld [vmem:[#allocation4 + $0x3e8] sm:$0xf]
    %v1020 = vpack.c.bf16 %v1003, %v1003
    %v1037 = vunpack.c.l.b16 %v1004
    %v1038 = vunpack.c.l.b16 %v1005
    %v1039 = vunpack.c.l.b16 %v1006
    %v1040 = vunpack.c.l.b16 %v1007
    %v1041 = vunpack.c.l.b16 %v1008
    %v1042 = vunpack.c.l.b16 %v1009
    %v1043 = vunpack.c.l.b16 %v1010
    %v1044 = vunpack.c.l.b16 %v1011
    %v1045 = vunpack.c.l.b16 %v1012
    %v1046 = vunpack.c.l.b16 %v1013
    %v1047 = vunpack.c.l.b16 %v1014
    %v1048 = vunpack.c.l.b16 %v1015
    %v1049 = vunpack.c.l.b16 %v1016
    %v1050 = vunpack.c.l.b16 %v1017
    %v1051 = vunpack.c.l.b16 %v1018
    %v1052 = vunpack.c.l.b16 %v1019
    %v1053 = vpack.c.b16 %v1038, %v1037
    %v1054 = vpack.c.b16 %v1040, %v1039
    %v1055 = vpack.c.b16 %v1042, %v1041
    %v1056 = vpack.c.b16 %v1044, %v1043
    %v1057 = vpack.c.b16 %v1046, %v1045
    %v1058 = vpack.c.b16 %v1048, %v1047
    %v1059 = vpack.c.b16 %v1050, %v1049
    %v1060 = vpack.c.b16 %v1052, %v1051
    %1069 = vmatprep.subr.bf16.mxu0 0
    %1070 = vmatpush1.bf16.msra.mxu0 %v1060
    %1071 = vmatprep.subr.bf16.mxu0 0
    %1072 = vmatpush1.bf16.msra.mxu0 %v1059
    %1073 = vmatprep.subr.bf16.mxu0 0
    %1074 = vmatpush1.bf16.msra.mxu0 %v1058
    %1075 = vmatprep.subr.bf16.mxu0 0
    %1076 = vmatpush1.bf16.msra.mxu0 %v1057
    %1077 = vmatprep.subr.bf16.mxu0 0
    %1078 = vmatpush1.bf16.msra.mxu0 %v1056
    %1079 = vmatprep.subr.bf16.mxu0 0
    %1080 = vmatpush1.bf16.msra.mxu0 %v1055
    %1081 = vmatprep.subr.bf16.mxu0 0
    %1082 = vmatpush1.bf16.msra.mxu0 %v1054
    %1083 = vmatprep.subr.bf16.mxu0 0
    %1084 = vmatpush1.bf16.msra.mxu0 %v1053
    %1085 = vmatprep.subr.bf16.mxu0 0
    %1086 = vmatpush2.bf16.msra.mxu0 0
    %1087 = vmatprep.subr.bf16.mxu0 0
    %1088 = vmatpush2.bf16.msra.mxu0 0
    %1089 = vmatprep.subr.bf16.mxu0 0
    %1090 = vmatpush2.bf16.msra.mxu0 0
    %1091 = vmatprep.subr.bf16.mxu0 0
    %1092 = vmatpush2.bf16.msra.mxu0 0
    %1093 = vmatprep.subr.bf16.mxu0 0
    %1094 = vmatpush2.bf16.msra.mxu0 0
    %1095 = vmatprep.subr.bf16.mxu0 0
    %1096 = vmatpush2.bf16.msra.mxu0 0
    %1097 = vmatprep.subr.bf16.mxu0 0
    %1098 = vmatpush2.bf16.msra.mxu0 0
    %1099 = vmatprep.subr.bf16.mxu0 0
    %1100 = vmatpush2.bf16.msra.mxu0 0
    %1101 = vmatprep.mubr.bf16.mxu0 0
    %1102 = vmatmul.mubr.bf16.gmra.mxu0 %v1020
    %v1103 = vpop.f32.mrf.mxu0
    %v1104 = vadd.f32 0.0, %v1103
    %v1105 = vpop.f32.mrf.mxu0
    %v1106 = vpop.f32.mrf.mxu0
    %v1107 = vpop.f32.mrf.mxu0
    %1108 = vdwg.mxu0
    %v1109 = vld [vmem:[#allocation4 + $0x3f0] sm:$0x1]
    %v1110 = vunpack.c.l.bf16 %v1109
    %v1111 = vsel %vm194, %v1104, 0.0
    %v1112 = vrot.slane %v1111, 4
    %v1113 = vadd.f32 %v1111, %v1112
    %v1114 = vrot.slane %v1113, 2
    %v1115 = vadd.f32 %v1113, %v1114
    %v1116 = vrot.slane %v1115, 1
    %v1117 = vadd.f32 %v1115, %v1116
    %v1118 = vmul.f32 %v1117, %v102
    %v1119 = vmul.f32 %v1104, %v1104
    %v1120 = vsel %vm194, %v1119, 0.0
    %v1121 = vrot.slane %v1120, 4
    %v1122 = vadd.f32 %v1120, %v1121
    %v1123 = vrot.slane %v1122, 2
    %v1124 = vadd.f32 %v1122, %v1123
    %v1125 = vrot.slane %v1124, 1
    %v1126 = vadd.f32 %v1124, %v1125
    %v1127 = vmul.f32 %v1126, %v102
    %v1128 = vmul.f32 %v1118, %v1118
    %v1129 = vsub.f32 %v1127, %v1128
    %v1130 = vmax.f32 %v1129, 0.0
    %v1131 = vsub.f32 %v1104, %v1118
    %v1132 = vadd.f32 %v1130, 1e-05
    %v1133 = vrsqrt.pop %v1132
    %v1134 = vmul.f32 %v1131, %v1133
    %v1135 = vlaneseq
    %v1136 = vshrl.u32 %v1135, 7
    %v1137 = vsub.s32 0, %v1136
    %v1138 = vrot.slane %v1110, %v1137
    %v1139 = vmul.f32 %v1134, %v1138
    %v1140 = vlaneseq
    %v1141 = vshrl.u32 %v1140, 7
    %v1142 = vsub.s32 1, %v1141
    %v1143 = vrot.slane %v1110, %v1142
    %v1144 = vadd.f32 %v1139, %v1143
    %v1145 = vmul.f32 %v1144, 0.01
    %v1146 = vmax.f32 %v1144, %v1145
    %v1147 = vld [vmem:[#allocation4 + $0x400] sm:$0xf]
    %v1148 = vld [vmem:[#allocation4 + $0x408] sm:$0xf]
    %v1149 = vld [vmem:[#allocation4 + $0x410] sm:$0xf]
    %v1150 = vld [vmem:[#allocation4 + $0x418] sm:$0xf]
    %v1151 = vld [vmem:[#allocation4 + $0x420] sm:$0xf]
    %v1152 = vld [vmem:[#allocation4 + $0x428] sm:$0xf]
    %v1153 = vld [vmem:[#allocation4 + $0x430] sm:$0xf]
    %v1154 = vld [vmem:[#allocation4 + $0x438] sm:$0xf]
    %v1155 = vpack.c.bf16 %v1146, %v1146
    %v1164 = vunpack.c.l.b16 %v1147
    %v1165 = vunpack.c.l.b16 %v1148
    %v1166 = vunpack.c.l.b16 %v1149
    %v1167 = vunpack.c.l.b16 %v1150
    %v1168 = vunpack.c.l.b16 %v1151
    %v1169 = vunpack.c.l.b16 %v1152
    %v1170 = vunpack.c.l.b16 %v1153
    %v1171 = vunpack.c.l.b16 %v1154
    %v1172 = vpack.c.b16 %v1165, %v1164
    %v1173 = vpack.c.b16 %v1167, %v1166
    %v1174 = vpack.c.b16 %v1169, %v1168
    %v1175 = vpack.c.b16 %v1171, %v1170
    %v1181 = vsel %vm194, %v1155, 0
    %1183 = vmatprep.subr.bf16.mxu0 0
    %1184 = vmatpush1.bf16.msra.mxu0 0
    %1185 = vmatprep.subr.bf16.mxu0 0
    %1186 = vmatpush1.bf16.msra.mxu0 0
    %1187 = vmatprep.subr.bf16.mxu0 0
    %1188 = vmatpush1.bf16.msra.mxu0 0
    %1189 = vmatprep.subr.bf16.mxu0 0
    %1190 = vmatpush1.bf16.msra.mxu0 0
    %1191 = vmatprep.subr.bf16.mxu0 0
    %1192 = vmatpush1.bf16.msra.mxu0 %v1175
    %1193 = vmatprep.subr.bf16.mxu0 0
    %1194 = vmatpush1.bf16.msra.mxu0 %v1174
    %1195 = vmatprep.subr.bf16.mxu0 0
    %1196 = vmatpush1.bf16.msra.mxu0 %v1173
    %1197 = vmatprep.subr.bf16.mxu0 0
    %1198 = vmatpush1.bf16.msra.mxu0 %v1172
    %1199 = vmatprep.subr.bf16.mxu0 0
    %1200 = vmatpush2.bf16.msra.mxu0 0
    %1201 = vmatprep.subr.bf16.mxu0 0
    %1202 = vmatpush2.bf16.msra.mxu0 0
    %1203 = vmatprep.subr.bf16.mxu0 0
    %1204 = vmatpush2.bf16.msra.mxu0 0
    %1205 = vmatprep.subr.bf16.mxu0 0
    %1206 = vmatpush2.bf16.msra.mxu0 0
    %1207 = vmatprep.subr.bf16.mxu0 0
    %1208 = vmatpush2.bf16.msra.mxu0 0
    %1209 = vmatprep.subr.bf16.mxu0 0
    %1210 = vmatpush2.bf16.msra.mxu0 0
    %1211 = vmatprep.subr.bf16.mxu0 0
    %1212 = vmatpush2.bf16.msra.mxu0 0
    %1213 = vmatprep.subr.bf16.mxu0 0
    %1214 = vmatpush2.bf16.msra.mxu0 0
    %1215 = vmatprep.mubr.bf16.mxu0 0
    %1216 = vmatmul.mubr.bf16.gmra.mxu0 %v1181
    %v1217 = vpop.f32.mrf.mxu0
    %v1218 = vadd.f32 0.0, %v1217
    %v1219 = vpop.f32.mrf.mxu0
    %v1220 = vpop.f32.mrf.mxu0
    %v1221 = vpop.f32.mrf.mxu0
    %1222 = vdwg.mxu0
    %v1223 = vld [vmem:[#allocation4 + $0x440] sm:$0x1]
    %v1224 = vunpack.c.l.bf16 %v1223
    %v1225 = vsel %vm94, %v1218, 0.0
    %v1226 = vrot.slane %v1225, 4
    %v1227 = vadd.f32 %v1225, %v1226
    %v1228 = vrot.slane %v1227, 2
    %v1229 = vadd.f32 %v1227, %v1228
    %v1230 = vrot.slane %v1229, 1
    %v1231 = vadd.f32 %v1229, %v1230
    %v1232 = vmul.f32 %v1231, %v102
    %v1233 = vmul.f32 %v1218, %v1218
    %v1234 = vsel %vm94, %v1233, 0.0
    %v1235 = vrot.slane %v1234, 4
    %v1236 = vadd.f32 %v1234, %v1235
    %v1237 = vrot.slane %v1236, 2
    %v1238 = vadd.f32 %v1236, %v1237
    %v1239 = vrot.slane %v1238, 1
    %v1240 = vadd.f32 %v1238, %v1239
    %v1241 = vmul.f32 %v1240, %v102
    %v1242 = vmul.f32 %v1232, %v1232
    %v1243 = vsub.f32 %v1241, %v1242
    %v1244 = vmax.f32 %v1243, 0.0
    %v1245 = vsub.f32 %v1218, %v1232
    %v1246 = vadd.f32 %v1244, 1e-05
    %v1247 = vrsqrt.pop %v1246
    %v1248 = vmul.f32 %v1245, %v1247
    %v1249 = vlaneseq
    %v1250 = vshrl.u32 %v1249, 7
    %v1251 = vsub.s32 0, %v1250
    %v1252 = vrot.slane %v1224, %v1251
    %v1253 = vmul.f32 %v1248, %v1252
    %v1254 = vlaneseq
    %v1255 = vshrl.u32 %v1254, 7
    %v1256 = vsub.s32 1, %v1255
    %v1257 = vrot.slane %v1224, %v1256
    %v1258 = vadd.f32 %v1253, %v1257
    %v1259 = vmul.f32 %v1258, 0.01
    %v1260 = vmax.f32 %v1258, %v1259
    %v1261 = vld [vmem:[#allocation4 + $0x470] sm:$0x1]
    %v1262 = vunpack.c.l.bf16 %v1261
    %v1263 = vld [vmem:[#allocation4 + $0x450] sm:$0xf]
    %v1264 = vld [vmem:[#allocation4 + $0x458] sm:$0xf]
    %v1265 = vld [vmem:[#allocation4 + $0x460] sm:$0xf]
    %v1266 = vld [vmem:[#allocation4 + $0x468] sm:$0xf]
    %v1267 = vpack.c.bf16 %v1260, %v1260
    %v1268 = vlaneseq
    %v1269 = vshrl.u32 %v1268, 7
    %v1270 = vsub.s32 0, %v1269
    %v1271 = vrot.slane %v1262, %v1270
    %v1276 = vunpack.c.l.b16 %v1263
    %v1277 = vunpack.c.l.b16 %v1264
    %v1278 = vunpack.c.l.b16 %v1265
    %v1279 = vunpack.c.l.b16 %v1266
    %v1280 = vpack.c.b16 %v1277, %v1276
    %v1281 = vpack.c.b16 %v1279, %v1278
    %v1285 = vsel %vm94, %v1267, 0
    %1287 = vmatprep.subr.bf16.mxu0 0
    %1288 = vmatpush1.bf16.msra.mxu0 0
    %1289 = vmatprep.subr.bf16.mxu0 0
    %1290 = vmatpush1.bf16.msra.mxu0 0
    %1291 = vmatprep.subr.bf16.mxu0 0
    %1292 = vmatpush1.bf16.msra.mxu0 0
    %1293 = vmatprep.subr.bf16.mxu0 0
    %1294 = vmatpush1.bf16.msra.mxu0 0
    %1295 = vmatprep.subr.bf16.mxu0 0
    %1296 = vmatpush1.bf16.msra.mxu0 0
    %1297 = vmatprep.subr.bf16.mxu0 0
    %1298 = vmatpush1.bf16.msra.mxu0 0
    %1299 = vmatprep.subr.bf16.mxu0 0
    %1300 = vmatpush1.bf16.msra.mxu0 %v1281
    %1301 = vmatprep.subr.bf16.mxu0 0
    %1302 = vmatpush1.bf16.msra.mxu0 %v1280
    %1303 = vmatprep.subr.bf16.mxu0 0
    %1304 = vmatpush2.bf16.msra.mxu0 0
    %1305 = vmatprep.subr.bf16.mxu0 0
    %1306 = vmatpush2.bf16.msra.mxu0 0
    %1307 = vmatprep.subr.bf16.mxu0 0
    %1308 = vmatpush2.bf16.msra.mxu0 0
    %1309 = vmatprep.subr.bf16.mxu0 0
    %1310 = vmatpush2.bf16.msra.mxu0 0
    %1311 = vmatprep.subr.bf16.mxu0 0
    %1312 = vmatpush2.bf16.msra.mxu0 0
    %1313 = vmatprep.subr.bf16.mxu0 0
    %1314 = vmatpush2.bf16.msra.mxu0 0
    %1315 = vmatprep.subr.bf16.mxu0 0
    %1316 = vmatpush2.bf16.msra.mxu0 0
    %1317 = vmatprep.subr.bf16.mxu0 0
    %1318 = vmatpush2.bf16.msra.mxu0 0
    %1319 = vmatprep.mubr.bf16.mxu0 0
    %1320 = vmatmul.mubr.bf16.gmra.mxu0 %v1285
    %v1321 = vpop.f32.mrf.mxu0
    %v1322 = vadd.f32 %v1271, %v1321
    %v1323 = vpop.f32.mrf.mxu0
    %v1324 = vpop.f32.mrf.mxu0
    %v1325 = vpop.f32.mrf.mxu0
    %1326 = vdwg.mxu0
    %v1327 = vmul.f32 %v1322, 0.5
    %v1328 = vtanh.pop %v1327
    %v1329 = vadd.f32 %v1328, 1.0
    %v1330 = vmul.f32 %v1329, 0.5
    %1331 = vst [vmem:[%s2] sm:$0xff] 0.0
    %1332 = vst.msk [vmem:[%s2] sm:$0xff] %vm48, %v1330
    %1334 = vrot.lane.b32.xlu0 %v723, 16
    %v1335 = vpop.permute.xlu0 %1334
    %vm1337 = vcmask 195712
    %1338 = vst.msk [vmem:[%s2] sm:$0xff] %vm1337, %v1335
    // Predicated region
    $region18: #{fwd.1} parent=1 // pred_check
      _
    $region19: #{fwd.1} parent=1 // pred_check_branch
      %1340 = sbr.rel (0) target = $region21
    $region20: #{fwd.1} parent=1 // pred_region
      _
    $region21: #{fwd.1} parent=1 // pred_fallthru
      _
    // Predicated region
    $region22: #{fwd.1} parent=1 // pred_check
      _
    $region23: #{fwd.1} parent=1 // pred_check_branch
      %1342 = sbr.rel (0) target = $region25
    $region24: #{fwd.1} parent=1 // pred_region
      _
    $region25: #{fwd.1} parent=1 // pred_fallthru
      _
    %1343 = vsyncpa [#allocation3], 1
    %1344 = vsyncpa [#allocation5], 1

</llo_original>
